<compile_context>
chip_gen: v6e
topology: v6e:2x2x1
jax: 0.10.0
libtpu: 0.0.40
codegen_flags: <defaults>
</compile_context>

<pallas_src>
import functools

import jax
import jax.numpy as jnp
from jax.experimental import pallas as pl
from jax.experimental.pallas import tpu as pltpu

_LANE = 128
_ROW_ALIGN = 16          # bf16 sublane packing: keep row tiles a multiple of 16
_HID_CHUNK = 512         # FFN hidden-dim chunk (multiple of 128)
_HAS_BUFFERED = hasattr(pl, "Buffered")


def _round_up(x, m):
    return (x + m - 1) // m * m


# --------------------------------------------------------------------------- kernel
def _ffn_gru_kernel(
    x_ref,      # (TM, dp)    bf16 input rows (residual), features zero-padded
    gamma_ref,  # (1, dp)     f32 LayerNorm weight (zero-padded)
    beta_ref,   # (1, dp)     f32 LayerNorm bias
    w1_ref,     # (dp, hp)    bf16 w_1 weight, (in, out) orientation
    b1_ref,     # (1, hp)     f32 w_1 bias
    w2_ref,     # (hp, dp)    bf16 w_2 weight
    b2_ref,     # (1, dp)     f32 w_2 bias
    wy_ref,     # (dp, 3*dp)  bf16 fused [w_z | w_r | w_g]   (acts on y)
    bz_ref,     # (1, dp)     f32 w_z bias (init -2)
    wu_ref,     # (dp, 2*dp)  bf16 fused [u_z | u_r]         (acts on residual)
    ug_ref,     # (dp, dp)    bf16 u_g                        (acts on r*residual)
    o_ref,      # (TM, dp)    f32 output
    *,
    d_true,     # real (unpadded) feature dim -> LayerNorm divisor
    hid_chunk,  # static chunk of the hidden dim
):
    dp = o_ref.shape[-1]
    hp = w1_ref.shape[-1]

    x_raw = x_ref[...]                        # bf16 stream
    res = x_raw.astype(jnp.float32)           # f32 residual (LN stats + final blend)
    rows = res.shape[0]

    # ---- LayerNorm(d_in, eps=1e-6): two-pass (stable), true-d divisor ----
    inv_d = 1.0 / d_true
    mu = jnp.sum(res, axis=-1, keepdims=True) * inv_d
    cen = res - mu
    if d_true != dp:
        # Padded lanes are zero in x, but (0 - mu) != 0: mask them out of the variance.
        lane = jax.lax.broadcasted_iota(jnp.int32, (1, dp), 1)
        cen = jnp.where(lane < d_true, cen, 0.0)
    var = jnp.sum(cen * cen, axis=-1, keepdims=True) * inv_d
    xn = cen * jax.lax.rsqrt(var + 1e-6) * gamma_ref[...] + beta_ref[...]

    # ---- y = relu(w_2(relu(w_1(xn)))): hidden dim chunked, bf16 ops / f32 acc ----
    xn_b = xn.astype(jnp.bfloat16)
    acc = jnp.zeros((rows, dp), jnp.float32)
    for start in range(0, hp, hid_chunk):
        stop = min(start + hid_chunk, hp)
        h = jnp.dot(xn_b, w1_ref[:, start:stop], preferred_element_type=jnp.float32)
        h = jnp.maximum(h + b1_ref[:, start:stop], 0.0).astype(jnp.bfloat16)
        acc = acc + jnp.dot(h, w2_ref[start:stop, :],
                            preferred_element_type=jnp.float32)
    y = jnp.maximum(acc + b2_ref[...], 0.0)

    # ---- GRUGate(residual, y): fused gate matmuls ----
    y_b = y.astype(jnp.bfloat16)
    res_b = x_raw.astype(jnp.bfloat16)        # no-op cast (already bf16)
    gy = jnp.dot(y_b, wy_ref[...], preferred_element_type=jnp.float32)
    gu = jnp.dot(res_b, wu_ref[...], preferred_element_type=jnp.float32)

    z = jax.nn.sigmoid(gy[:, 0 * dp:1 * dp] + bz_ref[...] + gu[:, 0 * dp:1 * dp])
    r = jax.nn.sigmoid(gy[:, 1 * dp:2 * dp] + gu[:, 1 * dp:2 * dp])
    rres_b = (r * res).astype(jnp.bfloat16)
    h_hat = jnp.tanh(
        gy[:, 2 * dp:3 * dp]
        + jnp.dot(rres_b, ug_ref[...], preferred_element_type=jnp.float32))
    o_ref[...] = ((1.0 - z) * res + z * h_hat).astype(o_ref.dtype)


# ------------------------------------------------------------------- VMEM accounting
def _weight_bytes(dp, hp):
    # bf16 matmul weights + f32 biases / LN params, VMEM-resident across the row grid.
    w_bf16 = dp * hp + hp * dp + dp * 3 * dp + dp * 2 * dp + dp * dp
    b_f32 = 2 * dp + hp + dp + dp
    return 2 * w_bf16 + 4 * b_f32


def _row_block_bytes(tm, dp, hid_chunk):
    # Double-buffered activation DMA (bf16 in, f32 out) plus a rough upper bound on the
    # f32/bf16 intermediates live inside one grid step (res, xn, acc/y, gy, gu, z, r,
    # h_hat, ... plus one (tm, hid_chunk) hidden slab and its bf16 copy).
    io = 2 * tm * dp * (2 + 4)
    interm = 4 * tm * (12 * dp + 2 * hid_chunk)
    return io + interm


def _pick_defaults():
    """Generation-aware (TM, vmem_limit) defaults."""
    try:
        cap = int(getattr(pltpu.get_tpu_info(), "vmem_capacity_bytes", 128 << 20))
    except Exception:  # interpret mode / unknown backend: assume 128 MiB class
        cap = 128 << 20
    if cap <= (64 << 20):          # v7x-class TensorCore (64 MiB VMEM)
        return 256, 56 << 20
    return 1024, 100 << 20         # v5e / v6e (128 MiB VMEM)


# -------------------------------------------------------------------- parameter prep
def prepare_params(params, d_in, dhid):
    """Pad to lane multiples, fuse gate weights, cast matmul weights to bf16."""
    dp = _round_up(d_in, _LANE)
    hp = _round_up(dhid, _LANE)

    def pad2(w, rows, cols):
        return jnp.pad(w, ((0, rows - w.shape[0]), (0, cols - w.shape[1])))

    wz = pad2(params["wz"], dp, dp)
    wr = pad2(params["wr"], dp, dp)
    wg = pad2(params["wg"], dp, dp)
    uz = pad2(params["uz"], dp, dp)
    ur = pad2(params["ur"], dp, dp)

    return {
        "ln_gamma": pad2(params["ln_gamma"], 1, dp),
        "ln_beta": pad2(params["ln_beta"], 1, dp),
        "w1": pad2(params["w1"], dp, hp).astype(jnp.bfloat16),
        "b1": pad2(params["b1"], 1, hp),
        "w2": pad2(params["w2"], hp, dp).astype(jnp.bfloat16),
        "b2": pad2(params["b2"], 1, dp),
        "wy": jnp.concatenate([wz, wr, wg], axis=1).astype(jnp.bfloat16),
        "bz": pad2(params["bz"], 1, dp),           # only the z gate has a bias
        "wu": jnp.concatenate([uz, ur], axis=1).astype(jnp.bfloat16),
        "ug": pad2(params["ug"], dp, dp).astype(jnp.bfloat16),
    }


# ------------------------------------------------------------------------ pallas call
@functools.partial(
    jax.jit,
    static_argnames=("d_true", "tm", "hid_chunk", "vmem_limit", "single_buffer"))
def _forward_2d(x2d, gamma, beta, w1, b1, w2, b2, wy, bz, wu, ug, *,
                d_true, tm, hid_chunk, vmem_limit, single_buffer):
    n_rows, dp = x2d.shape
    hp = b1.shape[-1]

    def w_spec(shape):
        # Constant block index -> weight stays VMEM-resident across the row grid.
        # Single-buffer it (it is DMA'd only once), halving its VMEM footprint.
        if single_buffer:
            return pl.BlockSpec(shape, lambda i: (0, 0), pipeline_mode=pl.Buffered(1))
        return pl.BlockSpec(shape, lambda i: (0, 0))

    row_in_spec = pl.BlockSpec((tm, dp), lambda i: (i, 0))
    row_out_spec = pl.BlockSpec((tm, dp), lambda i: (i, 0))

    cost = pl.CostEstimate(
        flops=int(2 * n_rows * (2 * dp * hp + 6 * dp * dp)),
        transcendentals=int(3 * n_rows * dp),
        bytes_accessed=int(n_rows * dp * (2 + 4) + _weight_bytes(dp, hp)),
    )

    return pl.pallas_call(
        functools.partial(_ffn_gru_kernel, d_true=d_true, hid_chunk=hid_chunk),
        out_shape=jax.ShapeDtypeStruct((n_rows, dp), jnp.float32),
        grid=(pl.cdiv(n_rows, tm),),
        in_specs=[
            row_in_spec,
            w_spec((1, dp)), w_spec((1, dp)),          # gamma, beta
            w_spec((dp, hp)), w_spec((1, hp)),         # w1, b1
            w_spec((hp, dp)), w_spec((1, dp)),         # w2, b2
            w_spec((dp, 3 * dp)), w_spec((1, dp)),     # wy, bz
            w_spec((dp, 2 * dp)),                      # wu
            w_spec((dp, dp)),                          # ug
        ],
        out_specs=row_out_spec,
        compiler_params=pltpu.CompilerParams(
            dimension_semantics=("parallel",),         # megacore split on v7x
            vmem_limit_bytes=vmem_limit,
        ),
        cost_estimate=cost,
    )(x2d, gamma, beta, w1, b1, w2, b2, wy, bz, wu, ug)


def positionwise_feed_forward(x, prepped, tm=None):
    """x: (B, S, d_in) float32 (or bf16). prepped: output of prepare_params."""
    B, S, d = x.shape
    N = B * S
    dp = prepped["ln_gamma"].shape[-1]
    hp = prepped["b1"].shape[-1]

    tm_default, vmem_limit = _pick_defaults()
    hid_chunk = min(_HID_CHUNK, hp)

    tm_eff = tm_default if tm is None else tm
    tm_eff = max(_ROW_ALIGN, min(tm_eff, _round_up(N, _ROW_ALIGN)))
    tm_eff = _round_up(tm_eff, _ROW_ALIGN)

    # Shrink TM until resident weights + per-step working set fit the VMEM budget.
    wbytes = _weight_bytes(dp, hp) * (1 if _HAS_BUFFERED else 2)
    while tm_eff > 64 and wbytes + _row_block_bytes(tm_eff, dp, hid_chunk) > vmem_limit:
        tm_eff //= 2
    if wbytes + _row_block_bytes(min(tm_eff, 64), dp, hid_chunk) > vmem_limit:
        # TODO(synk): add a K-tiled weight pipeline for models whose weights alone
        # exceed the VMEM budget (d >~ 1536 / dhid >~ 6144 on 64-MiB parts).
        raise ValueError(
            f"FFN weights (~{wbytes / 2**20:.1f} MiB) do not fit the VMEM-resident "
            f"strategy under a {vmem_limit / 2**20:.0f} MiB limit.")

    # v7x has two TensorCores; give the "parallel" row grid at least 2 steps.
    if pl.cdiv(N, tm_eff) == 1 and N > 2 * _ROW_ALIGN:
        tm_eff = _round_up(pl.cdiv(N, 2), _ROW_ALIGN)

    # Feature-pad (no-op when d is lane-aligned) and stream rows as bf16.
    x2d = x.reshape(N, d).astype(jnp.bfloat16)
    if dp != d:
        x2d = jnp.pad(x2d, ((0, 0), (0, dp - d)))

    args = (x2d, prepped["ln_gamma"], prepped["ln_beta"], prepped["w1"], prepped["b1"],
            prepped["w2"], prepped["b2"], prepped["wy"], prepped["bz"], prepped["wu"],
            prepped["ug"])
    kw = dict(d_true=d, tm=tm_eff, hid_chunk=hid_chunk, vmem_limit=vmem_limit)

    if _HAS_BUFFERED:
        try:
            out2d = _forward_2d(*args, single_buffer=True, **kw)
        except Exception:
            # This JAX build rejected pipeline_mode=pl.Buffered(1); fall back to the
            # (verified) default double-buffered weight specs.
            out2d = _forward_2d(*args, single_buffer=False, **kw)
    else:
        out2d = _forward_2d(*args, single_buffer=False, **kw)

    if dp != d:
        out2d = out2d[:, :d]
    return out2d.reshape(B, S, d)


# --------------------------------------------------------------------------- testing
def make_params(key, d_in, dhid):
    """Deterministic synthetic parameters, pre-transposed to (in, out)."""
    ks = jax.random.split(key, 10)
    s = 0.1
    return {
        "ln_gamma": jnp.ones((1, d_in), jnp.float32),
        "ln_beta": jnp.zeros((1, d_in), jnp.float32),
        "w1": s * jax.random.normal(ks[0], (d_in, dhid), jnp.float32),
        "b1": s * jax.random.normal(ks[1], (1, dhid), jnp.float32),
        "w2": s * jax.random.normal(ks[2], (dhid, d_in), jnp.float32),
        "b2": s * jax.random.normal(ks[3], (1, d_in), jnp.float32),
        "wz": s * jax.random.normal(ks[4], (d_in, d_in), jnp.float32),
        # linear_w_z.bias initialized to -2 per GRUGate.init_bias()
        "bz": jnp.full((1, d_in), -2.0, jnp.float32),
        "uz": s * jax.random.normal(ks[5], (d_in, d_in), jnp.float32),
        "wr": s * jax.random.normal(ks[6], (d_in, d_in), jnp.float32),
        "ur": s * jax.random.normal(ks[7], (d_in, d_in), jnp.float32),
        "wg": s * jax.random.normal(ks[8], (d_in, d_in), jnp.float32),
        "ug": s * jax.random.normal(ks[9], (d_in, d_in), jnp.float32),
    }


def reference_forward(x, params):
    """Pure-JAX f32 reference of the PyTorch module (eval mode, dropout never applied)."""
    res = x
    mu = jnp.mean(x, axis=-1, keepdims=True)
    var = jnp.mean((x - mu) ** 2, axis=-1, keepdims=True)
    xn = (x - mu) / jnp.sqrt(var + 1e-6)
    xn = xn * params["ln_gamma"][0] + params["ln_beta"][0]
    h = jnp.maximum(xn @ params["w1"] + params["b1"][0], 0.0)
    y = jnp.maximum(h @ params["w2"] + params["b2"][0], 0.0)
    z = jax.nn.sigmoid(y @ params["wz"] + params["bz"][0] + res @ params["uz"])
    r = jax.nn.sigmoid(y @ params["wr"] + res @ params["ur"])
    h_hat = jnp.tanh(y @ params["wg"] + (r * res) @ params["ug"])
    return (1.0 - z) * res + z * h_hat


if __name__ == "__main__":
    key = jax.random.PRNGKey(0)
    k_x, k_p = jax.random.split(key)

    B, S, d_in, dhid = 2, 8, 32, 64
    x = jax.random.normal(k_x, (B, S, d_in), jnp.float32)
    params = make_params(k_p, d_in, dhid)
    prepped = prepare_params(params, d_in, dhid)

    out = positionwise_feed_forward(x, prepped)
    out = jax.block_until_ready(out)
    assert out.shape == (B, S, d_in) and out.dtype == jnp.float32

    ref = reference_forward(x, params)
    max_err = float(jnp.max(jnp.abs(out - ref)))
    assert max_err < 5e-2, f"max abs error vs reference: {max_err}"
    print("KERNEL_OK")
</pallas_src>

<mosaic_0001>
module attributes {stable_mosaic.version = 11 : i64} {
  func.func @_ffn_gru_kernel(%arg0: i32, %arg1: memref<16x128xbf16, #tpu.memory_space<vmem>>, %arg2: memref<1x128xf32, #tpu.memory_space<vmem>>, %arg3: memref<1x128xf32, #tpu.memory_space<vmem>>, %arg4: memref<128x128xbf16, #tpu.memory_space<vmem>>, %arg5: memref<1x128xf32, #tpu.memory_space<vmem>>, %arg6: memref<128x128xbf16, #tpu.memory_space<vmem>>, %arg7: memref<1x128xf32, #tpu.memory_space<vmem>>, %arg8: memref<128x384xbf16, #tpu.memory_space<vmem>>, %arg9: memref<1x128xf32, #tpu.memory_space<vmem>>, %arg10: memref<128x256xbf16, #tpu.memory_space<vmem>>, %arg11: memref<128x128xbf16, #tpu.memory_space<vmem>>, %arg12: memref<16x128xf32, #tpu.memory_space<vmem>>) attributes {dimension_semantics = [#tpu.dimension_semantics<parallel>], iteration_bounds = array<i64: 1>, scalar_prefetch = 0 : i64, scratch_operands = 0 : i64, tpu.core_type = #tpu.core_type<tc>, window_params = [{transform_indices = @transform_0, window_bounds = array<i64: 16, 128>}, {pipeline_mode = #tpu.pipeline_mode<synchronous>, transform_indices = @transform_1, window_bounds = array<i64: 1, 128>}, {pipeline_mode = #tpu.pipeline_mode<synchronous>, transform_indices = @transform_2, window_bounds = array<i64: 1, 128>}, {pipeline_mode = #tpu.pipeline_mode<synchronous>, transform_indices = @transform_3, window_bounds = array<i64: 128, 128>}, {pipeline_mode = #tpu.pipeline_mode<synchronous>, transform_indices = @transform_4, window_bounds = array<i64: 1, 128>}, {pipeline_mode = #tpu.pipeline_mode<synchronous>, transform_indices = @transform_5, window_bounds = array<i64: 128, 128>}, {pipeline_mode = #tpu.pipeline_mode<synchronous>, transform_indices = @transform_6, window_bounds = array<i64: 1, 128>}, {pipeline_mode = #tpu.pipeline_mode<synchronous>, transform_indices = @transform_7, window_bounds = array<i64: 128, 384>}, {pipeline_mode = #tpu.pipeline_mode<synchronous>, transform_indices = @transform_8, window_bounds = array<i64: 1, 128>}, {pipeline_mode = #tpu.pipeline_mode<synchronous>, transform_indices = @transform_9, window_bounds = array<i64: 128, 256>}, {pipeline_mode = #tpu.pipeline_mode<synchronous>, transform_indices = @transform_10, window_bounds = array<i64: 128, 128>}, {transform_indices = @transform_11, window_bounds = array<i64: 16, 128>}]} {
    %c0 = arith.constant 0 : index
    %c0_0 = arith.constant 0 : index
    %0 = vector.load %arg1[%c0, %c0_0] : memref<16x128xbf16, #tpu.memory_space<vmem>>, vector<16x128xbf16>
    %1 = arith.extf %0 : vector<16x128xbf16> to vector<16x128xf32>
    %cst = arith.constant dense<0.000000e+00> : vector<16xf32>
    %2 = vector.multi_reduction <add>, %1, %cst [1] : vector<16x128xf32> to vector<16xf32>
    %3 = vector.shape_cast %2 : vector<16xf32> to vector<16x1xf32>
    %cst_1 = arith.constant 3.125000e-02 : f32
    %4 = vector.broadcast %cst_1 : f32 to vector<16x1xf32>
    %5 = arith.mulf %3, %4 : vector<16x1xf32>
    %6 = vector.broadcast %5 : vector<16x1xf32> to vector<16x128xf32>
    %7 = arith.subf %1, %6 : vector<16x128xf32>
    %8 = tpu.iota {dimensions = array<i32: 1>} : vector<1x128xi32>
    %c32_i32 = arith.constant 32 : i32
    %9 = vector.broadcast %c32_i32 : i32 to vector<1x128xi32>
    %10 = arith.cmpi slt, %8, %9 : vector<1x128xi32>
    %cst_2 = arith.constant 0.000000e+00 : f32
    %11 = vector.shape_cast %10 : vector<1x128xi1> to vector<1x128xi1>
    %12 = vector.broadcast %11 : vector<1x128xi1> to vector<16x128xi1>
    %13 = vector.broadcast %cst_2 : f32 to vector<16x128xf32>
    %14 = arith.select %12, %7, %13 : vector<16x128xi1>, vector<16x128xf32>
    %15 = arith.mulf %14, %14 : vector<16x128xf32>
    %cst_3 = arith.constant dense<0.000000e+00> : vector<16xf32>
    %16 = vector.multi_reduction <add>, %15, %cst_3 [1] : vector<16x128xf32> to vector<16xf32>
    %17 = vector.shape_cast %16 : vector<16xf32> to vector<16x1xf32>
    %cst_4 = arith.constant 3.125000e-02 : f32
    %18 = vector.broadcast %cst_4 : f32 to vector<16x1xf32>
    %19 = arith.mulf %17, %18 : vector<16x1xf32>
    %cst_5 = arith.constant 9.99999997E-7 : f32
    %20 = vector.broadcast %cst_5 : f32 to vector<16x1xf32>
    %21 = arith.addf %19, %20 : vector<16x1xf32>
    %22 = math.rsqrt %21 : vector<16x1xf32>
    %23 = vector.broadcast %22 : vector<16x1xf32> to vector<16x128xf32>
    %24 = arith.mulf %14, %23 : vector<16x128xf32>
    %c0_6 = arith.constant 0 : index
    %c0_7 = arith.constant 0 : index
    %25 = vector.load %arg2[%c0_6, %c0_7] : memref<1x128xf32, #tpu.memory_space<vmem>>, vector<1x128xf32>
    %26 = vector.broadcast %25 : vector<1x128xf32> to vector<16x128xf32>
    %27 = arith.mulf %24, %26 : vector<16x128xf32>
    %c0_8 = arith.constant 0 : index
    %c0_9 = arith.constant 0 : index
    %28 = vector.load %arg3[%c0_8, %c0_9] : memref<1x128xf32, #tpu.memory_space<vmem>>, vector<1x128xf32>
    %29 = vector.broadcast %28 : vector<1x128xf32> to vector<16x128xf32>
    %30 = arith.addf %27, %29 : vector<16x128xf32>
    %31 = arith.truncf %30 : vector<16x128xf32> to vector<16x128xbf16>
    %cst_10 = arith.constant 0.000000e+00 : f32
    %32 = vector.broadcast %cst_10 : f32 to vector<16x128xf32>
    %c0_11 = arith.constant 0 : index
    %c0_12 = arith.constant 0 : index
    %33 = vector.load %arg4[%c0_11, %c0_12] : memref<128x128xbf16, #tpu.memory_space<vmem>>, vector<128x128xbf16>
    %cst_13 = arith.constant dense<0.000000e+00> : vector<16x128xf32>
    %34 = tpu.matmul %31, %33, %cst_13 {dimension_numbers = #tpu.dot_dimension_numbers<[1], [0], [0], [1], [0, 0, 1, 1], [], []>} : vector<16x128xbf16>, vector<128x128xbf16>, vector<16x128xf32> -> vector<16x128xf32>
    %c0_14 = arith.constant 0 : index
    %c0_15 = arith.constant 0 : index
    %35 = vector.load %arg5[%c0_14, %c0_15] : memref<1x128xf32, #tpu.memory_space<vmem>>, vector<1x128xf32>
    %36 = vector.broadcast %35 : vector<1x128xf32> to vector<16x128xf32>
    %37 = arith.addf %34, %36 : vector<16x128xf32>
    %cst_16 = arith.constant 0.000000e+00 : f32
    %38 = vector.broadcast %cst_16 : f32 to vector<16x128xf32>
    %39 = arith.maximumf %37, %38 : vector<16x128xf32>
    %40 = arith.truncf %39 : vector<16x128xf32> to vector<16x128xbf16>
    %c0_17 = arith.constant 0 : index
    %c0_18 = arith.constant 0 : index
    %41 = vector.load %arg6[%c0_17, %c0_18] : memref<128x128xbf16, #tpu.memory_space<vmem>>, vector<128x128xbf16>
    %cst_19 = arith.constant dense<0.000000e+00> : vector<16x128xf32>
    %42 = tpu.matmul %40, %41, %cst_19 {dimension_numbers = #tpu.dot_dimension_numbers<[1], [0], [0], [1], [0, 0, 1, 1], [], []>} : vector<16x128xbf16>, vector<128x128xbf16>, vector<16x128xf32> -> vector<16x128xf32>
    %43 = arith.addf %32, %42 : vector<16x128xf32>
    %c0_20 = arith.constant 0 : index
    %c0_21 = arith.constant 0 : index
    %44 = vector.load %arg7[%c0_20, %c0_21] : memref<1x128xf32, #tpu.memory_space<vmem>>, vector<1x128xf32>
    %45 = vector.broadcast %44 : vector<1x128xf32> to vector<16x128xf32>
    %46 = arith.addf %43, %45 : vector<16x128xf32>
    %cst_22 = arith.constant 0.000000e+00 : f32
    %47 = vector.broadcast %cst_22 : f32 to vector<16x128xf32>
    %48 = arith.maximumf %46, %47 : vector<16x128xf32>
    %49 = arith.truncf %48 : vector<16x128xf32> to vector<16x128xbf16>
    %c0_23 = arith.constant 0 : index
    %c0_24 = arith.constant 0 : index
    %50 = vector.load %arg8[%c0_23, %c0_24] : memref<128x384xbf16, #tpu.memory_space<vmem>>, vector<128x384xbf16>
    %cst_25 = arith.constant dense<0.000000e+00> : vector<16x384xf32>
    %51 = tpu.matmul %49, %50, %cst_25 {dimension_numbers = #tpu.dot_dimension_numbers<[1], [0], [0], [1], [0, 0, 1, 1], [], []>} : vector<16x128xbf16>, vector<128x384xbf16>, vector<16x384xf32> -> vector<16x384xf32>
    %c0_26 = arith.constant 0 : index
    %c0_27 = arith.constant 0 : index
    %52 = vector.load %arg10[%c0_26, %c0_27] : memref<128x256xbf16, #tpu.memory_space<vmem>>, vector<128x256xbf16>
    %cst_28 = arith.constant dense<0.000000e+00> : vector<16x256xf32>
    %53 = tpu.matmul %0, %52, %cst_28 {dimension_numbers = #tpu.dot_dimension_numbers<[1], [0], [0], [1], [0, 0, 1, 1], [], []>} : vector<16x128xbf16>, vector<128x256xbf16>, vector<16x256xf32> -> vector<16x256xf32>
    %54 = vector.extract_strided_slice %51 {offsets = [0, 0], sizes = [16, 128], strides = [1, 1]} : vector<16x384xf32> to vector<16x128xf32>
    %c0_29 = arith.constant 0 : index
    %c0_30 = arith.constant 0 : index
    %55 = vector.load %arg9[%c0_29, %c0_30] : memref<1x128xf32, #tpu.memory_space<vmem>>, vector<1x128xf32>
    %56 = vector.broadcast %55 : vector<1x128xf32> to vector<16x128xf32>
    %57 = arith.addf %54, %56 : vector<16x128xf32>
    %58 = vector.extract_strided_slice %53 {offsets = [0, 0], sizes = [16, 128], strides = [1, 1]} : vector<16x256xf32> to vector<16x128xf32>
    %59 = arith.addf %57, %58 : vector<16x128xf32>
    %60 = arith.negf %59 : vector<16x128xf32>
    %61 = math.exp %60 : vector<16x128xf32>
    %cst_31 = arith.constant 1.000000e+00 : f32
    %62 = vector.broadcast %cst_31 : f32 to vector<16x128xf32>
    %63 = arith.addf %62, %61 : vector<16x128xf32>
    %64 = arith.divf %62, %63 : vector<16x128xf32>
    %65 = vector.extract_strided_slice %51 {offsets = [0, 128], sizes = [16, 128], strides = [1, 1]} : vector<16x384xf32> to vector<16x128xf32>
    %66 = vector.extract_strided_slice %53 {offsets = [0, 128], sizes = [16, 128], strides = [1, 1]} : vector<16x256xf32> to vector<16x128xf32>
    %67 = arith.addf %65, %66 : vector<16x128xf32>
    %68 = arith.negf %67 : vector<16x128xf32>
    %69 = math.exp %68 : vector<16x128xf32>
    %cst_32 = arith.constant 1.000000e+00 : f32
    %70 = vector.broadcast %cst_32 : f32 to vector<16x128xf32>
    %71 = arith.addf %70, %69 : vector<16x128xf32>
    %72 = arith.divf %70, %71 : vector<16x128xf32>
    %73 = arith.mulf %72, %1 : vector<16x128xf32>
    %74 = arith.truncf %73 : vector<16x128xf32> to vector<16x128xbf16>
    %75 = vector.extract_strided_slice %51 {offsets = [0, 256], sizes = [16, 128], strides = [1, 1]} : vector<16x384xf32> to vector<16x128xf32>
    %c0_33 = arith.constant 0 : index
    %c0_34 = arith.constant 0 : index
    %76 = vector.load %arg11[%c0_33, %c0_34] : memref<128x128xbf16, #tpu.memory_space<vmem>>, vector<128x128xbf16>
    %cst_35 = arith.constant dense<0.000000e+00> : vector<16x128xf32>
    %77 = tpu.matmul %74, %76, %cst_35 {dimension_numbers = #tpu.dot_dimension_numbers<[1], [0], [0], [1], [0, 0, 1, 1], [], []>} : vector<16x128xbf16>, vector<128x128xbf16>, vector<16x128xf32> -> vector<16x128xf32>
    %78 = arith.addf %75, %77 : vector<16x128xf32>
    %79 = math.tanh %78 : vector<16x128xf32>
    %cst_36 = arith.constant 1.000000e+00 : f32
    %80 = vector.broadcast %cst_36 : f32 to vector<16x128xf32>
    %81 = arith.subf %80, %64 : vector<16x128xf32>
    %82 = arith.mulf %81, %1 : vector<16x128xf32>
    %83 = arith.mulf %64, %79 : vector<16x128xf32>
    %84 = arith.addf %82, %83 : vector<16x128xf32>
    %c0_37 = arith.constant 0 : index
    %c0_38 = arith.constant 0 : index
    %85 = vector.load %arg12[%c0_37, %c0_38] : memref<16x128xf32, #tpu.memory_space<vmem>>, vector<16x128xf32>
    tpu.vector_store %arg12[%c0_37, %c0_38], %84 {strides = array<i32>} : memref<16x128xf32, #tpu.memory_space<vmem>>, vector<16x128xf32>,
    return
  }
  func.func @transform_0(%arg0: i32) -> (i32, i32) {
    %c0_i32 = arith.constant 0 : i32
    %c0_i32_0 = arith.constant 0 : i32
    return %arg0, %c0_i32 : i32, i32
  }
  func.func @transform_1(%arg0: i32) -> (i32, i32) {
    %c0_i32 = arith.constant 0 : i32
    %c0_i32_0 = arith.constant 0 : i32
    %c0_i32_1 = arith.constant 0 : i32
    return %c0_i32, %c0_i32_0 : i32, i32
  }
  func.func @transform_2(%arg0: i32) -> (i32, i32) {
    %c0_i32 = arith.constant 0 : i32
    %c0_i32_0 = arith.constant 0 : i32
    %c0_i32_1 = arith.constant 0 : i32
    return %c0_i32, %c0_i32_0 : i32, i32
  }
  func.func @transform_3(%arg0: i32) -> (i32, i32) {
    %c0_i32 = arith.constant 0 : i32
    %c0_i32_0 = arith.constant 0 : i32
    %c0_i32_1 = arith.constant 0 : i32
    return %c0_i32, %c0_i32_0 : i32, i32
  }
  func.func @transform_4(%arg0: i32) -> (i32, i32) {
    %c0_i32 = arith.constant 0 : i32
    %c0_i32_0 = arith.constant 0 : i32
    %c0_i32_1 = arith.constant 0 : i32
    return %c0_i32, %c0_i32_0 : i32, i32
  }
  func.func @transform_5(%arg0: i32) -> (i32, i32) {
    %c0_i32 = arith.constant 0 : i32
    %c0_i32_0 = arith.constant 0 : i32
    %c0_i32_1 = arith.constant 0 : i32
    return %c0_i32, %c0_i32_0 : i32, i32
  }
  func.func @transform_6(%arg0: i32) -> (i32, i32) {
    %c0_i32 = arith.constant 0 : i32
    %c0_i32_0 = arith.constant 0 : i32
    %c0_i32_1 = arith.constant 0 : i32
    return %c0_i32, %c0_i32_0 : i32, i32
  }
  func.func @transform_7(%arg0: i32) -> (i32, i32) {
    %c0_i32 = arith.constant 0 : i32
    %c0_i32_0 = arith.constant 0 : i32
    %c0_i32_1 = arith.constant 0 : i32
    return %c0_i32, %c0_i32_0 : i32, i32
  }
  func.func @transform_8(%arg0: i32) -> (i32, i32) {
    %c0_i32 = arith.constant 0 : i32
    %c0_i32_0 = arith.constant 0 : i32
    %c0_i32_1 = arith.constant 0 : i32
    return %c0_i32, %c0_i32_0 : i32, i32
  }
  func.func @transform_9(%arg0: i32) -> (i32, i32) {
    %c0_i32 = arith.constant 0 : i32
    %c0_i32_0 = arith.constant 0 : i32
    %c0_i32_1 = arith.constant 0 : i32
    return %c0_i32, %c0_i32_0 : i32, i32
  }
  func.func @transform_10(%arg0: i32) -> (i32, i32) {
    %c0_i32 = arith.constant 0 : i32
    %c0_i32_0 = arith.constant 0 : i32
    %c0_i32_1 = arith.constant 0 : i32
    return %c0_i32, %c0_i32_0 : i32, i32
  }
  func.func @transform_11(%arg0: i32) -> (i32, i32) {
    %c0_i32 = arith.constant 0 : i32
    %c0_i32_0 = arith.constant 0 : i32
    return %arg0, %c0_i32 : i32, i32
  }
}

module attributes {stable_mosaic.version = 11 : i64} {
  func.func @_ffn_gru_kernel(%arg0: i32, %arg1: memref<16x128xbf16, #tpu.memory_space<vmem>>, %arg2: memref<1x128xf32, #tpu.memory_space<vmem>>, %arg3: memref<1x128xf32, #tpu.memory_space<vmem>>, %arg4: memref<128x128xbf16, #tpu.memory_space<vmem>>, %arg5: memref<1x128xf32, #tpu.memory_space<vmem>>, %arg6: memref<128x128xbf16, #tpu.memory_space<vmem>>, %arg7: memref<1x128xf32, #tpu.memory_space<vmem>>, %arg8: memref<128x384xbf16, #tpu.memory_space<vmem>>, %arg9: memref<1x128xf32, #tpu.memory_space<vmem>>, %arg10: memref<128x256xbf16, #tpu.memory_space<vmem>>, %arg11: memref<128x128xbf16, #tpu.memory_space<vmem>>, %arg12: memref<16x128xf32, #tpu.memory_space<vmem>>) attributes {dimension_semantics = [#tpu.dimension_semantics<parallel>], iteration_bounds = array<i64: 1>, scalar_prefetch = 0 : i64, scratch_operands = 0 : i64, tpu.core_type = #tpu.core_type<tc>, window_params = [{transform_indices = @transform_0, window_bounds = array<i64: 16, 128>}, {pipeline_mode = #tpu.pipeline_mode<synchronous>, transform_indices = @transform_1, window_bounds = array<i64: 1, 128>}, {pipeline_mode = #tpu.pipeline_mode<synchronous>, transform_indices = @transform_2, window_bounds = array<i64: 1, 128>}, {pipeline_mode = #tpu.pipeline_mode<synchronous>, transform_indices = @transform_3, window_bounds = array<i64: 128, 128>}, {pipeline_mode = #tpu.pipeline_mode<synchronous>, transform_indices = @transform_4, window_bounds = array<i64: 1, 128>}, {pipeline_mode = #tpu.pipeline_mode<synchronous>, transform_indices = @transform_5, window_bounds = array<i64: 128, 128>}, {pipeline_mode = #tpu.pipeline_mode<synchronous>, transform_indices = @transform_6, window_bounds = array<i64: 1, 128>}, {pipeline_mode = #tpu.pipeline_mode<synchronous>, transform_indices = @transform_7, window_bounds = array<i64: 128, 384>}, {pipeline_mode = #tpu.pipeline_mode<synchronous>, transform_indices = @transform_8, window_bounds = array<i64: 1, 128>}, {pipeline_mode = #tpu.pipeline_mode<synchronous>, transform_indices = @transform_9, window_bounds = array<i64: 128, 256>}, {pipeline_mode = #tpu.pipeline_mode<synchronous>, transform_indices = @transform_10, window_bounds = array<i64: 128, 128>}, {transform_indices = @transform_11, window_bounds = array<i64: 16, 128>}]} {
    %c0 = arith.constant 0 : index
    %c0_0 = arith.constant 0 : index
    %0 = vector.load %arg1[%c0, %c0_0] : memref<16x128xbf16, #tpu.memory_space<vmem>>, vector<16x128xbf16>
    %1 = arith.extf %0 : vector<16x128xbf16> to vector<16x128xf32>
    %cst = arith.constant dense<0.000000e+00> : vector<16xf32>
    %2 = vector.multi_reduction <add>, %1, %cst [1] : vector<16x128xf32> to vector<16xf32>
    %3 = vector.shape_cast %2 : vector<16xf32> to vector<16x1xf32>
    %cst_1 = arith.constant 3.125000e-02 : f32
    %4 = vector.broadcast %cst_1 : f32 to vector<16x1xf32>
    %5 = arith.mulf %3, %4 : vector<16x1xf32>
    %6 = vector.broadcast %5 : vector<16x1xf32> to vector<16x128xf32>
    %7 = arith.subf %1, %6 : vector<16x128xf32>
    %8 = tpu.iota {dimensions = array<i32: 1>} : vector<1x128xi32>
    %c32_i32 = arith.constant 32 : i32
    %9 = vector.broadcast %c32_i32 : i32 to vector<1x128xi32>
    %10 = arith.cmpi slt, %8, %9 : vector<1x128xi32>
    %cst_2 = arith.constant 0.000000e+00 : f32
    %11 = vector.shape_cast %10 : vector<1x128xi1> to vector<1x128xi1>
    %12 = vector.broadcast %11 : vector<1x128xi1> to vector<16x128xi1>
    %13 = vector.broadcast %cst_2 : f32 to vector<16x128xf32>
    %14 = arith.select %12, %7, %13 : vector<16x128xi1>, vector<16x128xf32>
    %15 = arith.mulf %14, %14 : vector<16x128xf32>
    %cst_3 = arith.constant dense<0.000000e+00> : vector<16xf32>
    %16 = vector.multi_reduction <add>, %15, %cst_3 [1] : vector<16x128xf32> to vector<16xf32>
    %17 = vector.shape_cast %16 : vector<16xf32> to vector<16x1xf32>
    %cst_4 = arith.constant 3.125000e-02 : f32
    %18 = vector.broadcast %cst_4 : f32 to vector<16x1xf32>
    %19 = arith.mulf %17, %18 : vector<16x1xf32>
    %cst_5 = arith.constant 9.99999997E-7 : f32
    %20 = vector.broadcast %cst_5 : f32 to vector<16x1xf32>
    %21 = arith.addf %19, %20 : vector<16x1xf32>
    %22 = math.rsqrt %21 : vector<16x1xf32>
    %23 = vector.broadcast %22 : vector<16x1xf32> to vector<16x128xf32>
    %24 = arith.mulf %14, %23 : vector<16x128xf32>
    %c0_6 = arith.constant 0 : index
    %c0_7 = arith.constant 0 : index
    %25 = vector.load %arg2[%c0_6, %c0_7] : memref<1x128xf32, #tpu.memory_space<vmem>>, vector<1x128xf32>
    %26 = vector.broadcast %25 : vector<1x128xf32> to vector<16x128xf32>
    %27 = arith.mulf %24, %26 : vector<16x128xf32>
    %c0_8 = arith.constant 0 : index
    %c0_9 = arith.constant 0 : index
    %28 = vector.load %arg3[%c0_8, %c0_9] : memref<1x128xf32, #tpu.memory_space<vmem>>, vector<1x128xf32>
    %29 = vector.broadcast %28 : vector<1x128xf32> to vector<16x128xf32>
    %30 = arith.addf %27, %29 : vector<16x128xf32>
    %31 = arith.truncf %30 : vector<16x128xf32> to vector<16x128xbf16>
    %cst_10 = arith.constant 0.000000e+00 : f32
    %32 = vector.broadcast %cst_10 : f32 to vector<16x128xf32>
    %c0_11 = arith.constant 0 : index
    %c0_12 = arith.constant 0 : index
    %33 = vector.load %arg4[%c0_11, %c0_12] : memref<128x128xbf16, #tpu.memory_space<vmem>>, vector<128x128xbf16>
    %cst_13 = arith.constant dense<0.000000e+00> : vector<16x128xf32>
    %34 = tpu.matmul %31, %33, %cst_13 {dimension_numbers = #tpu.dot_dimension_numbers<[1], [0], [0], [1], [0, 0, 1, 1], [], []>} : vector<16x128xbf16>, vector<128x128xbf16>, vector<16x128xf32> -> vector<16x128xf32>
    %c0_14 = arith.constant 0 : index
    %c0_15 = arith.constant 0 : index
    %35 = vector.load %arg5[%c0_14, %c0_15] : memref<1x128xf32, #tpu.memory_space<vmem>>, vector<1x128xf32>
    %36 = vector.broadcast %35 : vector<1x128xf32> to vector<16x128xf32>
    %37 = arith.addf %34, %36 : vector<16x128xf32>
    %cst_16 = arith.constant 0.000000e+00 : f32
    %38 = vector.broadcast %cst_16 : f32 to vector<16x128xf32>
    %39 = arith.maximumf %37, %38 : vector<16x128xf32>
    %40 = arith.truncf %39 : vector<16x128xf32> to vector<16x128xbf16>
    %c0_17 = arith.constant 0 : index
    %c0_18 = arith.constant 0 : index
    %41 = vector.load %arg6[%c0_17, %c0_18] : memref<128x128xbf16, #tpu.memory_space<vmem>>, vector<128x128xbf16>
    %cst_19 = arith.constant dense<0.000000e+00> : vector<16x128xf32>
    %42 = tpu.matmul %40, %41, %cst_19 {dimension_numbers = #tpu.dot_dimension_numbers<[1], [0], [0], [1], [0, 0, 1, 1], [], []>} : vector<16x128xbf16>, vector<128x128xbf16>, vector<16x128xf32> -> vector<16x128xf32>
    %43 = arith.addf %32, %42 : vector<16x128xf32>
    %c0_20 = arith.constant 0 : index
    %c0_21 = arith.constant 0 : index
    %44 = vector.load %arg7[%c0_20, %c0_21] : memref<1x128xf32, #tpu.memory_space<vmem>>, vector<1x128xf32>
    %45 = vector.broadcast %44 : vector<1x128xf32> to vector<16x128xf32>
    %46 = arith.addf %43, %45 : vector<16x128xf32>
    %cst_22 = arith.constant 0.000000e+00 : f32
    %47 = vector.broadcast %cst_22 : f32 to vector<16x128xf32>
    %48 = arith.maximumf %46, %47 : vector<16x128xf32>
    %49 = arith.truncf %48 : vector<16x128xf32> to vector<16x128xbf16>
    %c0_23 = arith.constant 0 : index
    %c0_24 = arith.constant 0 : index
    %50 = vector.load %arg8[%c0_23, %c0_24] : memref<128x384xbf16, #tpu.memory_space<vmem>>, vector<128x384xbf16>
    %cst_25 = arith.constant dense<0.000000e+00> : vector<16x384xf32>
    %51 = tpu.matmul %49, %50, %cst_25 {dimension_numbers = #tpu.dot_dimension_numbers<[1], [0], [0], [1], [0, 0, 1, 1], [], []>} : vector<16x128xbf16>, vector<128x384xbf16>, vector<16x384xf32> -> vector<16x384xf32>
    %c0_26 = arith.constant 0 : index
    %c0_27 = arith.constant 0 : index
    %52 = vector.load %arg10[%c0_26, %c0_27] : memref<128x256xbf16, #tpu.memory_space<vmem>>, vector<128x256xbf16>
    %cst_28 = arith.constant dense<0.000000e+00> : vector<16x256xf32>
    %53 = tpu.matmul %0, %52, %cst_28 {dimension_numbers = #tpu.dot_dimension_numbers<[1], [0], [0], [1], [0, 0, 1, 1], [], []>} : vector<16x128xbf16>, vector<128x256xbf16>, vector<16x256xf32> -> vector<16x256xf32>
    %54 = vector.extract_strided_slice %51 {offsets = [0, 0], sizes = [16, 128], strides = [1, 1]} : vector<16x384xf32> to vector<16x128xf32>
    %c0_29 = arith.constant 0 : index
    %c0_30 = arith.constant 0 : index
    %55 = vector.load %arg9[%c0_29, %c0_30] : memref<1x128xf32, #tpu.memory_space<vmem>>, vector<1x128xf32>
    %56 = vector.broadcast %55 : vector<1x128xf32> to vector<16x128xf32>
    %57 = arith.addf %54, %56 : vector<16x128xf32>
    %58 = vector.extract_strided_slice %53 {offsets = [0, 0], sizes = [16, 128], strides = [1, 1]} : vector<16x256xf32> to vector<16x128xf32>
    %59 = arith.addf %57, %58 : vector<16x128xf32>
    %60 = arith.negf %59 : vector<16x128xf32>
    %61 = math.exp %60 : vector<16x128xf32>
    %cst_31 = arith.constant 1.000000e+00 : f32
    %62 = vector.broadcast %cst_31 : f32 to vector<16x128xf32>
    %63 = arith.addf %62, %61 : vector<16x128xf32>
    %64 = arith.divf %62, %63 : vector<16x128xf32>
    %65 = vector.extract_strided_slice %51 {offsets = [0, 128], sizes = [16, 128], strides = [1, 1]} : vector<16x384xf32> to vector<16x128xf32>
    %66 = vector.extract_strided_slice %53 {offsets = [0, 128], sizes = [16, 128], strides = [1, 1]} : vector<16x256xf32> to vector<16x128xf32>
    %67 = arith.addf %65, %66 : vector<16x128xf32>
    %68 = arith.negf %67 : vector<16x128xf32>
    %69 = math.exp %68 : vector<16x128xf32>
    %cst_32 = arith.constant 1.000000e+00 : f32
    %70 = vector.broadcast %cst_32 : f32 to vector<16x128xf32>
    %71 = arith.addf %70, %69 : vector<16x128xf32>
    %72 = arith.divf %70, %71 : vector<16x128xf32>
    %73 = arith.mulf %72, %1 : vector<16x128xf32>
    %74 = arith.truncf %73 : vector<16x128xf32> to vector<16x128xbf16>
    %75 = vector.extract_strided_slice %51 {offsets = [0, 256], sizes = [16, 128], strides = [1, 1]} : vector<16x384xf32> to vector<16x128xf32>
    %c0_33 = arith.constant 0 : index
    %c0_34 = arith.constant 0 : index
    %76 = vector.load %arg11[%c0_33, %c0_34] : memref<128x128xbf16, #tpu.memory_space<vmem>>, vector<128x128xbf16>
    %cst_35 = arith.constant dense<0.000000e+00> : vector<16x128xf32>
    %77 = tpu.matmul %74, %76, %cst_35 {dimension_numbers = #tpu.dot_dimension_numbers<[1], [0], [0], [1], [0, 0, 1, 1], [], []>} : vector<16x128xbf16>, vector<128x128xbf16>, vector<16x128xf32> -> vector<16x128xf32>
    %78 = arith.addf %75, %77 : vector<16x128xf32>
    %79 = math.tanh %78 : vector<16x128xf32>
    %cst_36 = arith.constant 1.000000e+00 : f32
    %80 = vector.broadcast %cst_36 : f32 to vector<16x128xf32>
    %81 = arith.subf %80, %64 : vector<16x128xf32>
    %82 = arith.mulf %81, %1 : vector<16x128xf32>
    %83 = arith.mulf %64, %79 : vector<16x128xf32>
    %84 = arith.addf %82, %83 : vector<16x128xf32>
    %c0_37 = arith.constant 0 : index
    %c0_38 = arith.constant 0 : index
    %85 = vector.load %arg12[%c0_37, %c0_38] : memref<16x128xf32, #tpu.memory_space<vmem>>, vector<16x128xf32>
    tpu.vector_store %arg12[%c0_37, %c0_38], %84 {strides = array<i32>} : memref<16x128xf32, #tpu.memory_space<vmem>>, vector<16x128xf32>,
    return
  }
  func.func @transform_0(%arg0: i32) -> (i32, i32) {
    %c0_i32 = arith.constant 0 : i32
    %c0_i32_0 = arith.constant 0 : i32
    return %arg0, %c0_i32 : i32, i32
  }
  func.func @transform_1(%arg0: i32) -> (i32, i32) {
    %c0_i32 = arith.constant 0 : i32
    %c0_i32_0 = arith.constant 0 : i32
    %c0_i32_1 = arith.constant 0 : i32
    return %c0_i32, %c0_i32_0 : i32, i32
  }
  func.func @transform_2(%arg0: i32) -> (i32, i32) {
    %c0_i32 = arith.constant 0 : i32
    %c0_i32_0 = arith.constant 0 : i32
    %c0_i32_1 = arith.constant 0 : i32
    return %c0_i32, %c0_i32_0 : i32, i32
  }
  func.func @transform_3(%arg0: i32) -> (i32, i32) {
    %c0_i32 = arith.constant 0 : i32
    %c0_i32_0 = arith.constant 0 : i32
    %c0_i32_1 = arith.constant 0 : i32
    return %c0_i32, %c0_i32_0 : i32, i32
  }
  func.func @transform_4(%arg0: i32) -> (i32, i32) {
    %c0_i32 = arith.constant 0 : i32
    %c0_i32_0 = arith.constant 0 : i32
    %c0_i32_1 = arith.constant 0 : i32
    return %c0_i32, %c0_i32_0 : i32, i32
  }
  func.func @transform_5(%arg0: i32) -> (i32, i32) {
    %c0_i32 = arith.constant 0 : i32
    %c0_i32_0 = arith.constant 0 : i32
    %c0_i32_1 = arith.constant 0 : i32
    return %c0_i32, %c0_i32_0 : i32, i32
  }
  func.func @transform_6(%arg0: i32) -> (i32, i32) {
    %c0_i32 = arith.constant 0 : i32
    %c0_i32_0 = arith.constant 0 : i32
    %c0_i32_1 = arith.constant 0 : i32
    return %c0_i32, %c0_i32_0 : i32, i32
  }
  func.func @transform_7(%arg0: i32) -> (i32, i32) {
    %c0_i32 = arith.constant 0 : i32
    %c0_i32_0 = arith.constant 0 : i32
    %c0_i32_1 = arith.constant 0 : i32
    return %c0_i32, %c0_i32_0 : i32, i32
  }
  func.func @transform_8(%arg0: i32) -> (i32, i32) {
    %c0_i32 = arith.constant 0 : i32
    %c0_i32_0 = arith.constant 0 : i32
    %c0_i32_1 = arith.constant 0 : i32
    return %c0_i32, %c0_i32_0 : i32, i32
  }
  func.func @transform_9(%arg0: i32) -> (i32, i32) {
    %c0_i32 = arith.constant 0 : i32
    %c0_i32_0 = arith.constant 0 : i32
    %c0_i32_1 = arith.constant 0 : i32
    return %c0_i32, %c0_i32_0 : i32, i32
  }
  func.func @transform_10(%arg0: i32) -> (i32, i32) {
    %c0_i32 = arith.constant 0 : i32
    %c0_i32_0 = arith.constant 0 : i32
    %c0_i32_1 = arith.constant 0 : i32
    return %c0_i32, %c0_i32_0 : i32, i32
  }
  func.func @transform_11(%arg0: i32) -> (i32, i32) {
    %c0_i32 = arith.constant 0 : i32
    %c0_i32_0 = arith.constant 0 : i32
    return %arg0, %c0_i32 : i32, i32
  }
}

</mosaic_0001>

<llo_original>
// kernel: _forward_2d.1
$region0: #{_forward_2d.1}
  #allocation0 [shape = 'u32[]', space=smem, size = 0x4, offset = 0x4, fixed_abs, tag = 'smem constant byte address 0x4 - core index']
  #allocation1 [shape = 'u32[144,128]{1,0:T(1,128)}', space=vmem, size = 0x12000, scoped, tag = 'internal scratch']
  %s0 = inlined_call_operand.hbm [shape: bf16[16,128], index: 0, kind: input, shape index: {}]
  %s1 = inlined_call_operand.vmem [shape: f32[1,128], index: 1, kind: input, shape index: {}]
  %s2 = inlined_call_operand.vmem [shape: f32[1,128], index: 2, kind: input, shape index: {}]
  %s3 = inlined_call_operand.hbm [shape: bf16[128,128], index: 3, kind: input, shape index: {}]
  %s4 = inlined_call_operand.vmem [shape: f32[1,128], index: 4, kind: input, shape index: {}]
  %s5 = inlined_call_operand.hbm [shape: bf16[128,128], index: 5, kind: input, shape index: {}]
  %s6 = inlined_call_operand.vmem [shape: f32[1,128], index: 6, kind: input, shape index: {}]
  %s7 = inlined_call_operand.hbm [shape: bf16[128,384], index: 7, kind: input, shape index: {}]
  %s8 = inlined_call_operand.vmem [shape: f32[1,128], index: 8, kind: input, shape index: {}]
  %s9 = inlined_call_operand.hbm [shape: bf16[128,256], index: 9, kind: input, shape index: {}]
  %s10 = inlined_call_operand.hbm [shape: bf16[128,128], index: 10, kind: input, shape index: {}]
  %s11 = inlined_call_operand.hbm [shape: f32[16,128], index: 11, kind: output, shape index: {}]
  %s12 = sld [smem:[#allocation0]]
  $region78: #{_forward_2d.1} parent=0
    _
  %s14 = ssub.s32 1, %s12
  %s15 = scalar_select 0, %s14, %s12
  $region1: #{_forward_2d.1} parent=0
    #allocation2 [shape = 'u8[4096]{0}', space=vmem, size = 0x1000, scoped, tag = 'input window, operand 0, single buffered']
    #allocation3 [shape = 's32[1]{0}', space=sflag, size = 0x4, scoped, tag = 'scoped memory for _forward_2d.1']
    #allocation4 [shape = 's32[1]{0}', space=sflag, size = 0x4, scoped, tag = 'scoped memory for _forward_2d.1']
    #allocation5 [shape = 'u8[32768]{0}', space=vmem, size = 0x8000, scoped, tag = 'input window, operand 3, single buffered']
    #allocation6 [shape = 's32[1]{0}', space=sflag, size = 0x4, scoped, tag = 'scoped memory for _forward_2d.1']
    #allocation7 [shape = 'u8[32768]{0}', space=vmem, size = 0x8000, scoped, tag = 'input window, operand 5, single buffered']
    #allocation8 [shape = 'u8[98304]{0}', space=vmem, size = 0x18000, scoped, tag = 'input window, operand 7, single buffered']
    #allocation9 [shape = 's32[1]{0}', space=sflag, size = 0x4, scoped, tag = 'scoped memory for _forward_2d.1']
    #allocation10 [shape = 'u8[65536]{0}', space=vmem, size = 0x10000, scoped, tag = 'input window, operand 9, single buffered']
    #allocation11 [shape = 'u8[32768]{0}', space=vmem, size = 0x8000, scoped, tag = 'input window, operand 10, single buffered']
    #allocation12 [shape = 's32[1]{0}', space=sflag, size = 0x4, scoped, tag = 'scoped memory for _forward_2d.1']
    #allocation13 [shape = 'u8[8192]{0}', space=vmem, size = 0x2000, scoped, tag = 'output window, operand 0, single buffered']
    %16 = vsyncpa [#allocation3], 0
    %17 = vsyncpa [#allocation6], 0
    %18 = vsyncpa [#allocation9], 0
    %19 = vsyncpa [#allocation12], 0
    %20 = vsyncpa [#allocation4], 0
    // Predicated region
    $region2: #{_forward_2d.1} parent=1 // pred_check
      _
    $region3: #{_forward_2d.1} parent=1 // pred_check_branch
      %22 = sbr.rel (0) target = $region5
    $region4: #{_forward_2d.1} parent=1 // pred_region
      %s24 = ssub.s32 128, 128
      %25 = vsyncadd [#allocation3], %s24
      %s26 = sshll.u32 [#allocation2], 4
      %s27 = int_to_ptr.vmem [resolvable:$true] %s26
      %32 = dma.hbm_to_vmem [thread:$0]  %s0, 128, %s27, [#allocation3], 64, 64, 4
    $region5: #{_forward_2d.1} parent=1 // pred_fallthru
      _
    // Predicated region
    $region6: #{_forward_2d.1} parent=1 // pred_check
      _
    $region7: #{_forward_2d.1} parent=1 // pred_check_branch
      %34 = sbr.rel (0) target = $region9
    $region8: #{_forward_2d.1} parent=1 // pred_region
      _
    $region9: #{_forward_2d.1} parent=1 // pred_fallthru
      _
    // Predicated region
    $region10: #{_forward_2d.1} parent=1 // pred_check
      _
    $region11: #{_forward_2d.1} parent=1 // pred_check_branch
      %36 = sbr.rel (0) target = $region13
    $region12: #{_forward_2d.1} parent=1 // pred_region
      _
    $region13: #{_forward_2d.1} parent=1 // pred_fallthru
      _
    // Predicated region
    $region14: #{_forward_2d.1} parent=1 // pred_check
      _
    $region15: #{_forward_2d.1} parent=1 // pred_check_branch
      %38 = sbr.rel (0) target = $region17
    $region16: #{_forward_2d.1} parent=1 // pred_region
      %s40 = ssub.s32 1024, 1024
      %41 = vsyncadd [#allocation6], %s40
      %s42 = sshll.u32 [#allocation5], 4
      %s43 = int_to_ptr.vmem [resolvable:$true] %s42
      %48 = dma.hbm_to_vmem [thread:$0]  %s3, 1024, %s43, [#allocation6], 64, 64, 4
    $region17: #{_forward_2d.1} parent=1 // pred_fallthru
      _
    // Predicated region
    $region18: #{_forward_2d.1} parent=1 // pred_check
      _
    $region19: #{_forward_2d.1} parent=1 // pred_check_branch
      %50 = sbr.rel (0) target = $region21
    $region20: #{_forward_2d.1} parent=1 // pred_region
      _
    $region21: #{_forward_2d.1} parent=1 // pred_fallthru
      _
    // Predicated region
    $region22: #{_forward_2d.1} parent=1 // pred_check
      _
    $region23: #{_forward_2d.1} parent=1 // pred_check_branch
      %52 = sbr.rel (0) target = $region25
    $region24: #{_forward_2d.1} parent=1 // pred_region
      %s54 = ssub.s32 1024, 1024
      %55 = vsyncadd [#allocation6], %s54
      %s56 = sshll.u32 [#allocation7], 4
      %s57 = int_to_ptr.vmem [resolvable:$true] %s56
      %62 = dma.hbm_to_vmem [thread:$0]  %s5, 1024, %s57, [#allocation6], 64, 64, 4
    $region25: #{_forward_2d.1} parent=1 // pred_fallthru
      _
    // Predicated region
    $region26: #{_forward_2d.1} parent=1 // pred_check
      _
    $region27: #{_forward_2d.1} parent=1 // pred_check_branch
      %64 = sbr.rel (0) target = $region29
    $region28: #{_forward_2d.1} parent=1 // pred_region
      _
    $region29: #{_forward_2d.1} parent=1 // pred_fallthru
      _
    // Predicated region
    $region30: #{_forward_2d.1} parent=1 // pred_check
      _
    $region31: #{_forward_2d.1} parent=1 // pred_check_branch
      %66 = sbr.rel (0) target = $region33
    $region32: #{_forward_2d.1} parent=1 // pred_region
      %s68 = ssub.s32 3072, 3072
      %69 = vsyncadd [#allocation9], %s68
      %s70 = sshll.u32 [#allocation8], 4
      %s71 = int_to_ptr.vmem [resolvable:$true] %s70
      %76 = dma.hbm_to_vmem [thread:$0]  %s7, 3072, %s71, [#allocation9], 192, 192, 12
    $region33: #{_forward_2d.1} parent=1 // pred_fallthru
      _
    // Predicated region
    $region34: #{_forward_2d.1} parent=1 // pred_check
      _
    $region35: #{_forward_2d.1} parent=1 // pred_check_branch
      %78 = sbr.rel (0) target = $region37
    $region36: #{_forward_2d.1} parent=1 // pred_region
      _
    $region37: #{_forward_2d.1} parent=1 // pred_fallthru
      _
    // Predicated region
    $region38: #{_forward_2d.1} parent=1 // pred_check
      _
    $region39: #{_forward_2d.1} parent=1 // pred_check_branch
      %80 = sbr.rel (0) target = $region41
    $region40: #{_forward_2d.1} parent=1 // pred_region
      %s82 = ssub.s32 2048, 2048
      %83 = vsyncadd [#allocation9], %s82
      %s84 = sshll.u32 [#allocation10], 4
      %s85 = int_to_ptr.vmem [resolvable:$true] %s84
      %90 = dma.hbm_to_vmem [thread:$0]  %s9, 2048, %s85, [#allocation9], 128, 128, 8
    $region41: #{_forward_2d.1} parent=1 // pred_fallthru
      _
    // Predicated region
    $region42: #{_forward_2d.1} parent=1 // pred_check
      _
    $region43: #{_forward_2d.1} parent=1 // pred_check_branch
      %92 = sbr.rel (0) target = $region45
    $region44: #{_forward_2d.1} parent=1 // pred_region
      %s94 = ssub.s32 1024, 1024
      %95 = vsyncadd [#allocation12], %s94
      %s96 = sshll.u32 [#allocation11], 4
      %s97 = int_to_ptr.vmem [resolvable:$true] %s96
      %102 = dma.hbm_to_vmem [thread:$0]  %s10, 1024, %s97, [#allocation12], 64, 64, 4
    $region45: #{_forward_2d.1} parent=1 // pred_fallthru
      _
    // Predicated region
    $region46: #{_forward_2d.1} parent=1 // pred_check
      _
    $region47: #{_forward_2d.1} parent=1 // pred_check_branch
      %104 = sbr.rel (0) target = $region49
    $region48: #{_forward_2d.1} parent=1 // pred_region
      %105 = dma.done [#allocation3], 128
    $region49: #{_forward_2d.1} parent=1 // pred_fallthru
      _
    // Predicated region
    $region50: #{_forward_2d.1} parent=1 // pred_check
      _
    $region51: #{_forward_2d.1} parent=1 // pred_check_branch
      %107 = sbr.rel (0) target = $region53
    $region52: #{_forward_2d.1} parent=1 // pred_region
      %108 = dma.done [#allocation6], 1024
    $region53: #{_forward_2d.1} parent=1 // pred_fallthru
      _
    // Predicated region
    $region54: #{_forward_2d.1} parent=1 // pred_check
      _
    $region55: #{_forward_2d.1} parent=1 // pred_check_branch
      %110 = sbr.rel (0) target = $region57
    $region56: #{_forward_2d.1} parent=1 // pred_region
      %111 = dma.done [#allocation6], 1024
    $region57: #{_forward_2d.1} parent=1 // pred_fallthru
      _
    // Predicated region
    $region58: #{_forward_2d.1} parent=1 // pred_check
      _
    $region59: #{_forward_2d.1} parent=1 // pred_check_branch
      %113 = sbr.rel (0) target = $region61
    $region60: #{_forward_2d.1} parent=1 // pred_region
      %114 = dma.done [#allocation9], 3072
    $region61: #{_forward_2d.1} parent=1 // pred_fallthru
      _
    // Predicated region
    $region62: #{_forward_2d.1} parent=1 // pred_check
      _
    $region63: #{_forward_2d.1} parent=1 // pred_check_branch
      %116 = sbr.rel (0) target = $region65
    $region64: #{_forward_2d.1} parent=1 // pred_region
      %117 = dma.done [#allocation9], 2048
    $region65: #{_forward_2d.1} parent=1 // pred_fallthru
      _
    // Predicated region
    $region66: #{_forward_2d.1} parent=1 // pred_check
      _
    $region67: #{_forward_2d.1} parent=1 // pred_check_branch
      %119 = sbr.rel (0) target = $region69
    $region68: #{_forward_2d.1} parent=1 // pred_region
      %120 = dma.done [#allocation12], 1024
    $region69: #{_forward_2d.1} parent=1 // pred_fallthru
      _
    %v122 = vld [vmem:[#allocation2] sm:$0xf]
    %v123 = vld [vmem:[#allocation2 + $0x4] sm:$0xf]
    %v124 = vunpack.c.l.bf16 %v122
    %v125 = vunpack.c.l.bf16 %v123
    %126 = vadd.xlane.f32.xlu0 %v124
    %v127 = vpop.xlane.xlu0 %126
    %128 = vadd.xlane.f32.xlu0 %v125
    %v129 = vpop.xlane.xlu0 %128
    %v130 = vmul.f32 %v127, 0.03125
    %v131 = vmul.f32 %v129, 0.03125
    %v132 = vsub.f32 %v124, %v130
    %v133 = vsub.f32 %v125, %v131
    %v134 = vlaneseq
    %v135 = vand.u32 %v134, 127
    %vm136 = vcmp.lt.s32.totalorder %v135, 32
    %v137 = vsel %vm136, 1, 0
    %vm138 = vcmp.eq.s32.totalorder %v137, 1
    %v139 = vsel %vm138, %v132, 0.0
    %v140 = vsel %vm138, %v133, 0.0
    %v141 = vmul.f32 %v139, %v139
    %v142 = vmul.f32 %v140, %v140
    %143 = vadd.xlane.f32.xlu0 %v141
    %v144 = vpop.xlane.xlu0 %143
    %145 = vadd.xlane.f32.xlu0 %v142
    %v146 = vpop.xlane.xlu0 %145
    %v147 = vmul.f32 %v144, 0.03125
    %v148 = vmul.f32 %v146, 0.03125
    %v149 = vadd.f32 %v147, 1e-06
    %v150 = vadd.f32 %v148, 1e-06
    %v151 = vrsqrt.pop %v149
    %v152 = vrsqrt.pop %v150
    %v153 = vmul.f32 %v139, %v151
    %v154 = vmul.f32 %v140, %v152
    %v155 = vld [vmem:[%s1] sm:$0x1]
    %v157 = vlaneseq
    %v158 = vshrl.u32 %v157, 7
    %v159 = vsub.s32 0, %v158
    %v160 = vrot.slane %v155, %v159
    %v162 = vmul.f32 %v153, %v160
    %v163 = vmul.f32 %v154, %v160
    %v164 = vld [vmem:[%s2] sm:$0x1]
    %v166 = vlaneseq
    %v167 = vshrl.u32 %v166, 7
    %v168 = vsub.s32 0, %v167
    %v169 = vrot.slane %v164, %v168
    %v171 = vadd.f32 %v162, %v169
    %v172 = vadd.f32 %v163, %v169
    %v173 = vpack.c.bf16 %v172, %v171
    %v174 = vld [vmem:[#allocation5] sm:$0xf]
    %v175 = vld [vmem:[#allocation5 + $0x4] sm:$0xf]
    %v176 = vld [vmem:[#allocation5 + $0x8] sm:$0xf]
    %v177 = vld [vmem:[#allocation5 + $0xc] sm:$0xf]
    %v178 = vld [vmem:[#allocation5 + $0x10] sm:$0xf]
    %v179 = vld [vmem:[#allocation5 + $0x14] sm:$0xf]
    %v180 = vld [vmem:[#allocation5 + $0x18] sm:$0xf]
    %v181 = vld [vmem:[#allocation5 + $0x1c] sm:$0xf]
    %v182 = vld [vmem:[#allocation5 + $0x20] sm:$0xf]
    %v183 = vld [vmem:[#allocation5 + $0x24] sm:$0xf]
    %v184 = vld [vmem:[#allocation5 + $0x28] sm:$0xf]
    %v185 = vld [vmem:[#allocation5 + $0x2c] sm:$0xf]
    %v186 = vld [vmem:[#allocation5 + $0x30] sm:$0xf]
    %v187 = vld [vmem:[#allocation5 + $0x34] sm:$0xf]
    %v188 = vld [vmem:[#allocation5 + $0x38] sm:$0xf]
    %v189 = vld [vmem:[#allocation5 + $0x3c] sm:$0xf]
    %v190 = vld [vmem:[%s4] sm:$0x1]
    %v192 = vlaneseq
    %v193 = vshrl.u32 %v192, 7
    %v194 = vsub.s32 0, %v193
    %v195 = vrot.slane %v190, %v194
    %v213 = vunpack.c.l.b16 %v174
    %v214 = vunpack.c.l.b16 %v175
    %v215 = vunpack.c.l.b16 %v176
    %v216 = vunpack.c.l.b16 %v177
    %v217 = vunpack.c.l.b16 %v178
    %v218 = vunpack.c.l.b16 %v179
    %v219 = vunpack.c.l.b16 %v180
    %v220 = vunpack.c.l.b16 %v181
    %v221 = vunpack.c.l.b16 %v182
    %v222 = vunpack.c.l.b16 %v183
    %v223 = vunpack.c.l.b16 %v184
    %v224 = vunpack.c.l.b16 %v185
    %v225 = vunpack.c.l.b16 %v186
    %v226 = vunpack.c.l.b16 %v187
    %v227 = vunpack.c.l.b16 %v188
    %v228 = vunpack.c.l.b16 %v189
    %v229 = vpack.c.b16 %v214, %v213
    %v230 = vpack.c.b16 %v216, %v215
    %v231 = vpack.c.b16 %v218, %v217
    %v232 = vpack.c.b16 %v220, %v219
    %v233 = vpack.c.b16 %v222, %v221
    %v234 = vpack.c.b16 %v224, %v223
    %v235 = vpack.c.b16 %v226, %v225
    %v236 = vpack.c.b16 %v228, %v227
    %245 = vmatprep.subr.bf16.mxu0 0
    %246 = vmatpush1.bf16.msra.mxu0 %v236
    %247 = vmatprep.subr.bf16.mxu0 0
    %248 = vmatpush1.bf16.msra.mxu0 %v235
    %249 = vmatprep.subr.bf16.mxu0 0
    %250 = vmatpush1.bf16.msra.mxu0 %v234
    %251 = vmatprep.subr.bf16.mxu0 0
    %252 = vmatpush1.bf16.msra.mxu0 %v233
    %253 = vmatprep.subr.bf16.mxu0 0
    %254 = vmatpush1.bf16.msra.mxu0 %v232
    %255 = vmatprep.subr.bf16.mxu0 0
    %256 = vmatpush1.bf16.msra.mxu0 %v231
    %257 = vmatprep.subr.bf16.mxu0 0
    %258 = vmatpush1.bf16.msra.mxu0 %v230
    %259 = vmatprep.subr.bf16.mxu0 0
    %260 = vmatpush1.bf16.msra.mxu0 %v229
    %261 = vmatprep.subr.bf16.mxu0 0
    %262 = vmatpush2.bf16.msra.mxu0 0
    %263 = vmatprep.subr.bf16.mxu0 0
    %264 = vmatpush2.bf16.msra.mxu0 0
    %265 = vmatprep.subr.bf16.mxu0 0
    %266 = vmatpush2.bf16.msra.mxu0 0
    %267 = vmatprep.subr.bf16.mxu0 0
    %268 = vmatpush2.bf16.msra.mxu0 0
    %269 = vmatprep.subr.bf16.mxu0 0
    %270 = vmatpush2.bf16.msra.mxu0 0
    %271 = vmatprep.subr.bf16.mxu0 0
    %272 = vmatpush2.bf16.msra.mxu0 0
    %273 = vmatprep.subr.bf16.mxu0 0
    %274 = vmatpush2.bf16.msra.mxu0 0
    %275 = vmatprep.subr.bf16.mxu0 0
    %276 = vmatpush2.bf16.msra.mxu0 0
    %277 = vmatprep.mubr.bf16.mxu0 0
    %278 = vmatmul.mubr.bf16.gmra.mxu0 %v173
    %v279 = vpop.f32.mrf.mxu0
    %v280 = vadd.f32 %v195, %v279
    %v281 = vpop.f32.mrf.mxu0
    %v282 = vpop.f32.mrf.mxu0
    %v283 = vadd.f32 %v195, %v282
    %v284 = vpop.f32.mrf.mxu0
    %285 = vdwg.mxu0
    %v286 = vmax.f32 %v280, 0.0
    %v287 = vmax.f32 %v283, 0.0
    %v288 = vpack.c.bf16 %v287, %v286
    %v289 = vld [vmem:[#allocation7] sm:$0xf]
    %v290 = vld [vmem:[#allocation7 + $0x4] sm:$0xf]
    %v291 = vld [vmem:[#allocation7 + $0x8] sm:$0xf]
    %v292 = vld [vmem:[#allocation7 + $0xc] sm:$0xf]
    %v293 = vld [vmem:[#allocation7 + $0x10] sm:$0xf]
    %v294 = vld [vmem:[#allocation7 + $0x14] sm:$0xf]
    %v295 = vld [vmem:[#allocation7 + $0x18] sm:$0xf]
    %v296 = vld [vmem:[#allocation7 + $0x1c] sm:$0xf]
    %v297 = vld [vmem:[#allocation7 + $0x20] sm:$0xf]
    %v298 = vld [vmem:[#allocation7 + $0x24] sm:$0xf]
    %v299 = vld [vmem:[#allocation7 + $0x28] sm:$0xf]
    %v300 = vld [vmem:[#allocation7 + $0x2c] sm:$0xf]
    %v301 = vld [vmem:[#allocation7 + $0x30] sm:$0xf]
    %v302 = vld [vmem:[#allocation7 + $0x34] sm:$0xf]
    %v303 = vld [vmem:[#allocation7 + $0x38] sm:$0xf]
    %v304 = vld [vmem:[#allocation7 + $0x3c] sm:$0xf]
    %v305 = vld [vmem:[%s6] sm:$0x1]
    %v307 = vlaneseq
    %v308 = vshrl.u32 %v307, 7
    %v309 = vsub.s32 0, %v308
    %v310 = vrot.slane %v305, %v309
    %v328 = vunpack.c.l.b16 %v289
    %v329 = vunpack.c.l.b16 %v290
    %v330 = vunpack.c.l.b16 %v291
    %v331 = vunpack.c.l.b16 %v292
    %v332 = vunpack.c.l.b16 %v293
    %v333 = vunpack.c.l.b16 %v294
    %v334 = vunpack.c.l.b16 %v295
    %v335 = vunpack.c.l.b16 %v296
    %v336 = vunpack.c.l.b16 %v297
    %v337 = vunpack.c.l.b16 %v298
    %v338 = vunpack.c.l.b16 %v299
    %v339 = vunpack.c.l.b16 %v300
    %v340 = vunpack.c.l.b16 %v301
    %v341 = vunpack.c.l.b16 %v302
    %v342 = vunpack.c.l.b16 %v303
    %v343 = vunpack.c.l.b16 %v304
    %v344 = vpack.c.b16 %v329, %v328
    %v345 = vpack.c.b16 %v331, %v330
    %v346 = vpack.c.b16 %v333, %v332
    %v347 = vpack.c.b16 %v335, %v334
    %v348 = vpack.c.b16 %v337, %v336
    %v349 = vpack.c.b16 %v339, %v338
    %v350 = vpack.c.b16 %v341, %v340
    %v351 = vpack.c.b16 %v343, %v342
    %360 = vmatprep.subr.bf16.mxu0 0
    %361 = vmatpush1.bf16.msra.mxu0 %v351
    %362 = vmatprep.subr.bf16.mxu0 0
    %363 = vmatpush1.bf16.msra.mxu0 %v350
    %364 = vmatprep.subr.bf16.mxu0 0
    %365 = vmatpush1.bf16.msra.mxu0 %v349
    %366 = vmatprep.subr.bf16.mxu0 0
    %367 = vmatpush1.bf16.msra.mxu0 %v348
    %368 = vmatprep.subr.bf16.mxu0 0
    %369 = vmatpush1.bf16.msra.mxu0 %v347
    %370 = vmatprep.subr.bf16.mxu0 0
    %371 = vmatpush1.bf16.msra.mxu0 %v346
    %372 = vmatprep.subr.bf16.mxu0 0
    %373 = vmatpush1.bf16.msra.mxu0 %v345
    %374 = vmatprep.subr.bf16.mxu0 0
    %375 = vmatpush1.bf16.msra.mxu0 %v344
    %376 = vmatprep.subr.bf16.mxu0 0
    %377 = vmatpush2.bf16.msra.mxu0 0
    %378 = vmatprep.subr.bf16.mxu0 0
    %379 = vmatpush2.bf16.msra.mxu0 0
    %380 = vmatprep.subr.bf16.mxu0 0
    %381 = vmatpush2.bf16.msra.mxu0 0
    %382 = vmatprep.subr.bf16.mxu0 0
    %383 = vmatpush2.bf16.msra.mxu0 0
    %384 = vmatprep.subr.bf16.mxu0 0
    %385 = vmatpush2.bf16.msra.mxu0 0
    %386 = vmatprep.subr.bf16.mxu0 0
    %387 = vmatpush2.bf16.msra.mxu0 0
    %388 = vmatprep.subr.bf16.mxu0 0
    %389 = vmatpush2.bf16.msra.mxu0 0
    %390 = vmatprep.subr.bf16.mxu0 0
    %391 = vmatpush2.bf16.msra.mxu0 0
    %392 = vmatprep.mubr.bf16.mxu0 0
    %393 = vmatmul.mubr.bf16.gmra.mxu0 %v288
    %v394 = vpop.f32.mrf.mxu0
    %v395 = vadd.f32 %v310, %v394
    %v396 = vpop.f32.mrf.mxu0
    %v397 = vpop.f32.mrf.mxu0
    %v398 = vadd.f32 %v310, %v397
    %v399 = vpop.f32.mrf.mxu0
    %400 = vdwg.mxu0
    %v401 = vmax.f32 %v395, 0.0
    %v402 = vmax.f32 %v398, 0.0
    %v403 = vpack.c.bf16 %v402, %v401
    %v404 = vld [vmem:[#allocation8] sm:$0xff]
    %v405 = vld [vmem:[#allocation8 + $0x8] sm:$0xf]
    %v406 = vld [vmem:[#allocation8 + $0xc] sm:$0xff]
    %v407 = vld [vmem:[#allocation8 + $0x14] sm:$0xf]
    %v408 = vld [vmem:[#allocation8 + $0x18] sm:$0xff]
    %v409 = vld [vmem:[#allocation8 + $0x20] sm:$0xf]
    %v410 = vld [vmem:[#allocation8 + $0x24] sm:$0xff]
    %v411 = vld [vmem:[#allocation8 + $0x2c] sm:$0xf]
    %v412 = vld [vmem:[#allocation8 + $0x30] sm:$0xff]
    %v413 = vld [vmem:[#allocation8 + $0x38] sm:$0xf]
    %v414 = vld [vmem:[#allocation8 + $0x3c] sm:$0xff]
    %v415 = vld [vmem:[#allocation8 + $0x44] sm:$0xf]
    %v416 = vld [vmem:[#allocation8 + $0x48] sm:$0xff]
    %v417 = vld [vmem:[#allocation8 + $0x50] sm:$0xf]
    %v418 = vld [vmem:[#allocation8 + $0x54] sm:$0xff]
    %v419 = vld [vmem:[#allocation8 + $0x5c] sm:$0xf]
    %v420 = vld [vmem:[#allocation8 + $0x60] sm:$0xff]
    %v421 = vld [vmem:[#allocation8 + $0x68] sm:$0xf]
    %v422 = vld [vmem:[#allocation8 + $0x6c] sm:$0xff]
    %v423 = vld [vmem:[#allocation8 + $0x74] sm:$0xf]
    %v424 = vld [vmem:[#allocation8 + $0x78] sm:$0xff]
    %v425 = vld [vmem:[#allocation8 + $0x80] sm:$0xf]
    %v426 = vld [vmem:[#allocation8 + $0x84] sm:$0xff]
    %v427 = vld [vmem:[#allocation8 + $0x8c] sm:$0xf]
    %v428 = vld [vmem:[#allocation8 + $0x90] sm:$0xff]
    %v429 = vld [vmem:[#allocation8 + $0x98] sm:$0xf]
    %v430 = vld [vmem:[#allocation8 + $0x9c] sm:$0xff]
    %v431 = vld [vmem:[#allocation8 + $0xa4] sm:$0xf]
    %v432 = vld [vmem:[#allocation8 + $0xa8] sm:$0xff]
    %v433 = vld [vmem:[#allocation8 + $0xb0] sm:$0xf]
    %v434 = vld [vmem:[#allocation8 + $0xb4] sm:$0xff]
    %v435 = vld [vmem:[#allocation8 + $0xbc] sm:$0xf]
    %v468 = vunpack.c.l.b16 %v404
    %v469 = vunpack.c.h.b16 %v404
    %v470 = vunpack.c.l.b16 %v405
    %v471 = vunpack.c.l.b16 %v406
    %v472 = vunpack.c.h.b16 %v406
    %v473 = vunpack.c.l.b16 %v407
    %v474 = vunpack.c.l.b16 %v408
    %v475 = vunpack.c.h.b16 %v408
    %v476 = vunpack.c.l.b16 %v409
    %v477 = vunpack.c.l.b16 %v410
    %v478 = vunpack.c.h.b16 %v410
    %v479 = vunpack.c.l.b16 %v411
    %v480 = vunpack.c.l.b16 %v412
    %v481 = vunpack.c.h.b16 %v412
    %v482 = vunpack.c.l.b16 %v413
    %v483 = vunpack.c.l.b16 %v414
    %v484 = vunpack.c.h.b16 %v414
    %v485 = vunpack.c.l.b16 %v415
    %v486 = vunpack.c.l.b16 %v416
    %v487 = vunpack.c.h.b16 %v416
    %v488 = vunpack.c.l.b16 %v417
    %v489 = vunpack.c.l.b16 %v418
    %v490 = vunpack.c.h.b16 %v418
    %v491 = vunpack.c.l.b16 %v419
    %v492 = vunpack.c.l.b16 %v420
    %v493 = vunpack.c.h.b16 %v420
    %v494 = vunpack.c.l.b16 %v421
    %v495 = vunpack.c.l.b16 %v422
    %v496 = vunpack.c.h.b16 %v422
    %v497 = vunpack.c.l.b16 %v423
    %v498 = vunpack.c.l.b16 %v424
    %v499 = vunpack.c.h.b16 %v424
    %v500 = vunpack.c.l.b16 %v425
    %v501 = vunpack.c.l.b16 %v426
    %v502 = vunpack.c.h.b16 %v426
    %v503 = vunpack.c.l.b16 %v427
    %v504 = vunpack.c.l.b16 %v428
    %v505 = vunpack.c.h.b16 %v428
    %v506 = vunpack.c.l.b16 %v429
    %v507 = vunpack.c.l.b16 %v430
    %v508 = vunpack.c.h.b16 %v430
    %v509 = vunpack.c.l.b16 %v431
    %v510 = vunpack.c.l.b16 %v432
    %v511 = vunpack.c.h.b16 %v432
    %v512 = vunpack.c.l.b16 %v433
    %v513 = vunpack.c.l.b16 %v434
    %v514 = vunpack.c.h.b16 %v434
    %v515 = vunpack.c.l.b16 %v435
    %v516 = vpack.c.b16 %v471, %v468
    %v517 = vpack.c.b16 %v472, %v469
    %v518 = vpack.c.b16 %v473, %v470
    %v519 = vpack.c.b16 %v477, %v474
    %v520 = vpack.c.b16 %v478, %v475
    %v521 = vpack.c.b16 %v479, %v476
    %v522 = vpack.c.b16 %v483, %v480
    %v523 = vpack.c.b16 %v484, %v481
    %v524 = vpack.c.b16 %v485, %v482
    %v525 = vpack.c.b16 %v489, %v486
    %v526 = vpack.c.b16 %v490, %v487
    %v527 = vpack.c.b16 %v491, %v488
    %v528 = vpack.c.b16 %v495, %v492
    %v529 = vpack.c.b16 %v496, %v493
    %v530 = vpack.c.b16 %v497, %v494
    %v531 = vpack.c.b16 %v501, %v498
    %v532 = vpack.c.b16 %v502, %v499
    %v533 = vpack.c.b16 %v503, %v500
    %v534 = vpack.c.b16 %v507, %v504
    %v535 = vpack.c.b16 %v508, %v505
    %v536 = vpack.c.b16 %v509, %v506
    %v537 = vpack.c.b16 %v513, %v510
    %v538 = vpack.c.b16 %v514, %v511
    %v539 = vpack.c.b16 %v515, %v512
    %564 = vmatprep.subr.bf16.mxu0 %v538
    %565 = vmatpush1.bf16.msra.mxu0 %v537
    %566 = vmatprep.subr.bf16.mxu0 %v535
    %567 = vmatpush1.bf16.msra.mxu0 %v534
    %568 = vmatprep.subr.bf16.mxu0 %v532
    %569 = vmatpush1.bf16.msra.mxu0 %v531
    %570 = vmatprep.subr.bf16.mxu0 %v529
    %571 = vmatpush1.bf16.msra.mxu0 %v528
    %572 = vmatprep.subr.bf16.mxu0 %v526
    %573 = vmatpush1.bf16.msra.mxu0 %v525
    %574 = vmatprep.subr.bf16.mxu0 %v523
    %575 = vmatpush1.bf16.msra.mxu0 %v522
    %576 = vmatprep.subr.bf16.mxu0 %v520
    %577 = vmatpush1.bf16.msra.mxu0 %v519
    %578 = vmatprep.subr.bf16.mxu0 %v517
    %579 = vmatpush1.bf16.msra.mxu0 %v516
    %580 = vmatprep.subr.bf16.mxu0 0
    %581 = vmatpush2.bf16.msra.mxu0 0
    %582 = vmatprep.subr.bf16.mxu0 0
    %583 = vmatpush2.bf16.msra.mxu0 0
    %584 = vmatprep.subr.bf16.mxu0 0
    %585 = vmatpush2.bf16.msra.mxu0 0
    %586 = vmatprep.subr.bf16.mxu0 0
    %587 = vmatpush2.bf16.msra.mxu0 0
    %588 = vmatprep.subr.bf16.mxu0 0
    %589 = vmatpush2.bf16.msra.mxu0 0
    %590 = vmatprep.subr.bf16.mxu0 0
    %591 = vmatpush2.bf16.msra.mxu0 0
    %592 = vmatprep.subr.bf16.mxu0 0
    %593 = vmatpush2.bf16.msra.mxu0 0
    %594 = vmatprep.subr.bf16.mxu0 0
    %595 = vmatpush2.bf16.msra.mxu0 0
    %596 = vmatprep.mubr.bf16.mxu0 0
    %597 = vmatmul.mubr.bf16.gmra.mxu0 %v403
    %v598 = vpop.f32.mrf.mxu0
    %v599 = vadd.f32 0.0, %v598
    %v600 = vpop.f32.mrf.mxu0
    %v601 = vadd.f32 0.0, %v600
    %v602 = vpop.f32.mrf.mxu0
    %v603 = vadd.f32 0.0, %v602
    %v604 = vpop.f32.mrf.mxu0
    %v605 = vadd.f32 0.0, %v604
    %606 = vdwg.mxu0
    %607 = vmatprep.subr.bf16.mxu0 0
    %608 = vmatpush1.bf16.msra.mxu0 %v539
    %609 = vmatprep.subr.bf16.mxu0 0
    %610 = vmatpush1.bf16.msra.mxu0 %v536
    %611 = vmatprep.subr.bf16.mxu0 0
    %612 = vmatpush1.bf16.msra.mxu0 %v533
    %613 = vmatprep.subr.bf16.mxu0 0
    %614 = vmatpush1.bf16.msra.mxu0 %v530
    %615 = vmatprep.subr.bf16.mxu0 0
    %616 = vmatpush1.bf16.msra.mxu0 %v527
    %617 = vmatprep.subr.bf16.mxu0 0
    %618 = vmatpush1.bf16.msra.mxu0 %v524
    %619 = vmatprep.subr.bf16.mxu0 0
    %620 = vmatpush1.bf16.msra.mxu0 %v521
    %621 = vmatprep.subr.bf16.mxu0 0
    %622 = vmatpush1.bf16.msra.mxu0 %v518
    %623 = vmatprep.subr.bf16.mxu0 0
    %624 = vmatpush2.bf16.msra.mxu0 0
    %625 = vmatprep.subr.bf16.mxu0 0
    %626 = vmatpush2.bf16.msra.mxu0 0
    %627 = vmatprep.subr.bf16.mxu0 0
    %628 = vmatpush2.bf16.msra.mxu0 0
    %629 = vmatprep.subr.bf16.mxu0 0
    %630 = vmatpush2.bf16.msra.mxu0 0
    %631 = vmatprep.subr.bf16.mxu0 0
    %632 = vmatpush2.bf16.msra.mxu0 0
    %633 = vmatprep.subr.bf16.mxu0 0
    %634 = vmatpush2.bf16.msra.mxu0 0
    %635 = vmatprep.subr.bf16.mxu0 0
    %636 = vmatpush2.bf16.msra.mxu0 0
    %637 = vmatprep.subr.bf16.mxu0 0
    %638 = vmatpush2.bf16.msra.mxu0 0
    %639 = vmatprep.mubr.bf16.mxu0 0
    %640 = vmatmul.mubr.bf16.gmra.mxu0 %v403
    %v641 = vpop.f32.mrf.mxu0
    %v642 = vadd.f32 0.0, %v641
    %v643 = vpop.f32.mrf.mxu0
    %v644 = vpop.f32.mrf.mxu0
    %v645 = vadd.f32 0.0, %v644
    %v646 = vpop.f32.mrf.mxu0
    %647 = vdwg.mxu0
    %v648 = vld [vmem:[#allocation10] sm:$0xff]
    %v649 = vld [vmem:[#allocation10 + $0x8] sm:$0xff]
    %v650 = vld [vmem:[#allocation10 + $0x10] sm:$0xff]
    %v651 = vld [vmem:[#allocation10 + $0x18] sm:$0xff]
    %v652 = vld [vmem:[#allocation10 + $0x20] sm:$0xff]
    %v653 = vld [vmem:[#allocation10 + $0x28] sm:$0xff]
    %v654 = vld [vmem:[#allocation10 + $0x30] sm:$0xff]
    %v655 = vld [vmem:[#allocation10 + $0x38] sm:$0xff]
    %v656 = vld [vmem:[#allocation10 + $0x40] sm:$0xff]
    %v657 = vld [vmem:[#allocation10 + $0x48] sm:$0xff]
    %v658 = vld [vmem:[#allocation10 + $0x50] sm:$0xff]
    %v659 = vld [vmem:[#allocation10 + $0x58] sm:$0xff]
    %v660 = vld [vmem:[#allocation10 + $0x60] sm:$0xff]
    %v661 = vld [vmem:[#allocation10 + $0x68] sm:$0xff]
    %v662 = vld [vmem:[#allocation10 + $0x70] sm:$0xff]
    %v663 = vld [vmem:[#allocation10 + $0x78] sm:$0xff]
    %v666 = vunpack.c.l.b16 %v122
    %v667 = vunpack.c.l.b16 %v123
    %v668 = vpack.c.b16 %v667, %v666
    %v686 = vunpack.c.l.b16 %v648
    %v687 = vunpack.c.h.b16 %v648
    %v688 = vunpack.c.l.b16 %v649
    %v689 = vunpack.c.h.b16 %v649
    %v690 = vunpack.c.l.b16 %v650
    %v691 = vunpack.c.h.b16 %v650
    %v692 = vunpack.c.l.b16 %v651
    %v693 = vunpack.c.h.b16 %v651
    %v694 = vunpack.c.l.b16 %v652
    %v695 = vunpack.c.h.b16 %v652
    %v696 = vunpack.c.l.b16 %v653
    %v697 = vunpack.c.h.b16 %v653
    %v698 = vunpack.c.l.b16 %v654
    %v699 = vunpack.c.h.b16 %v654
    %v700 = vunpack.c.l.b16 %v655
    %v701 = vunpack.c.h.b16 %v655
    %v702 = vunpack.c.l.b16 %v656
    %v703 = vunpack.c.h.b16 %v656
    %v704 = vunpack.c.l.b16 %v657
    %v705 = vunpack.c.h.b16 %v657
    %v706 = vunpack.c.l.b16 %v658
    %v707 = vunpack.c.h.b16 %v658
    %v708 = vunpack.c.l.b16 %v659
    %v709 = vunpack.c.h.b16 %v659
    %v710 = vunpack.c.l.b16 %v660
    %v711 = vunpack.c.h.b16 %v660
    %v712 = vunpack.c.l.b16 %v661
    %v713 = vunpack.c.h.b16 %v661
    %v714 = vunpack.c.l.b16 %v662
    %v715 = vunpack.c.h.b16 %v662
    %v716 = vunpack.c.l.b16 %v663
    %v717 = vunpack.c.h.b16 %v663
    %v718 = vpack.c.b16 %v688, %v686
    %v719 = vpack.c.b16 %v689, %v687
    %v720 = vpack.c.b16 %v692, %v690
    %v721 = vpack.c.b16 %v693, %v691
    %v722 = vpack.c.b16 %v696, %v694
    %v723 = vpack.c.b16 %v697, %v695
    %v724 = vpack.c.b16 %v700, %v698
    %v725 = vpack.c.b16 %v701, %v699
    %v726 = vpack.c.b16 %v704, %v702
    %v727 = vpack.c.b16 %v705, %v703
    %v728 = vpack.c.b16 %v708, %v706
    %v729 = vpack.c.b16 %v709, %v707
    %v730 = vpack.c.b16 %v712, %v710
    %v731 = vpack.c.b16 %v713, %v711
    %v732 = vpack.c.b16 %v716, %v714
    %v733 = vpack.c.b16 %v717, %v715
    %750 = vmatprep.subr.bf16.mxu0 %v733
    %751 = vmatpush1.bf16.msra.mxu0 %v732
    %752 = vmatprep.subr.bf16.mxu0 %v731
    %753 = vmatpush1.bf16.msra.mxu0 %v730
    %754 = vmatprep.subr.bf16.mxu0 %v729
    %755 = vmatpush1.bf16.msra.mxu0 %v728
    %756 = vmatprep.subr.bf16.mxu0 %v727
    %757 = vmatpush1.bf16.msra.mxu0 %v726
    %758 = vmatprep.subr.bf16.mxu0 %v725
    %759 = vmatpush1.bf16.msra.mxu0 %v724
    %760 = vmatprep.subr.bf16.mxu0 %v723
    %761 = vmatpush1.bf16.msra.mxu0 %v722
    %762 = vmatprep.subr.bf16.mxu0 %v721
    %763 = vmatpush1.bf16.msra.mxu0 %v720
    %764 = vmatprep.subr.bf16.mxu0 %v719
    %765 = vmatpush1.bf16.msra.mxu0 %v718
    %766 = vmatprep.subr.bf16.mxu0 0
    %767 = vmatpush2.bf16.msra.mxu0 0
    %768 = vmatprep.subr.bf16.mxu0 0
    %769 = vmatpush2.bf16.msra.mxu0 0
    %770 = vmatprep.subr.bf16.mxu0 0
    %771 = vmatpush2.bf16.msra.mxu0 0
    %772 = vmatprep.subr.bf16.mxu0 0
    %773 = vmatpush2.bf16.msra.mxu0 0
    %774 = vmatprep.subr.bf16.mxu0 0
    %775 = vmatpush2.bf16.msra.mxu0 0
    %776 = vmatprep.subr.bf16.mxu0 0
    %777 = vmatpush2.bf16.msra.mxu0 0
    %778 = vmatprep.subr.bf16.mxu0 0
    %779 = vmatpush2.bf16.msra.mxu0 0
    %780 = vmatprep.subr.bf16.mxu0 0
    %781 = vmatpush2.bf16.msra.mxu0 0
    %782 = vmatprep.mubr.bf16.mxu0 0
    %783 = vmatmul.mubr.bf16.gmra.mxu0 %v668
    %v784 = vpop.f32.mrf.mxu0
    %v785 = vadd.f32 0.0, %v784
    %v786 = vpop.f32.mrf.mxu0
    %v787 = vadd.f32 0.0, %v786
    %v788 = vpop.f32.mrf.mxu0
    %v789 = vadd.f32 0.0, %v788
    %v790 = vpop.f32.mrf.mxu0
    %v791 = vadd.f32 0.0, %v790
    %792 = vdwg.mxu0
    %v793 = vld [vmem:[%s8] sm:$0x1]
    %v795 = vlaneseq
    %v796 = vshrl.u32 %v795, 7
    %v797 = vsub.s32 0, %v796
    %v798 = vrot.slane %v793, %v797
    %v800 = vadd.f32 %v599, %v798
    %v801 = vadd.f32 %v603, %v798
    %v802 = vadd.f32 %v800, %v785
    %v803 = vadd.f32 %v801, %v789
    %v804 = vxor.u32 %v802, 2147483648
    %v805 = vxor.u32 %v803, 2147483648
    %v806 = vmul.f32 %v804, 1.442695
    %v807 = vpow.pop %v806
    %v808 = vmul.f32 %v805, 1.442695
    %v809 = vpow.pop %v808
    %v810 = vadd.f32 %v807, 1.0
    %v811 = vadd.f32 %v809, 1.0
    %v812 = vrcp.pop %v810
    %v813 = vmul.f32 1.0, %v812
    %v814 = vrcp.pop %v811
    %v815 = vmul.f32 1.0, %v814
    %v816 = vadd.f32 %v601, %v787
    %v817 = vadd.f32 %v605, %v791
    %v818 = vxor.u32 %v816, 2147483648
    %v819 = vxor.u32 %v817, 2147483648
    %v820 = vmul.f32 %v818, 1.442695
    %v821 = vpow.pop %v820
    %v822 = vmul.f32 %v819, 1.442695
    %v823 = vpow.pop %v822
    %v824 = vadd.f32 %v821, 1.0
    %v825 = vadd.f32 %v823, 1.0
    %v826 = vrcp.pop %v824
    %v827 = vmul.f32 1.0, %v826
    %v828 = vrcp.pop %v825
    %v829 = vmul.f32 1.0, %v828
    %v830 = vmul.f32 %v827, %v124
    %v831 = vmul.f32 %v829, %v125
    %v832 = vpack.c.bf16 %v831, %v830
    %v833 = vld [vmem:[#allocation11] sm:$0xf]
    %v834 = vld [vmem:[#allocation11 + $0x4] sm:$0xf]
    %v835 = vld [vmem:[#allocation11 + $0x8] sm:$0xf]
    %v836 = vld [vmem:[#allocation11 + $0xc] sm:$0xf]
    %v837 = vld [vmem:[#allocation11 + $0x10] sm:$0xf]
    %v838 = vld [vmem:[#allocation11 + $0x14] sm:$0xf]
    %v839 = vld [vmem:[#allocation11 + $0x18] sm:$0xf]
    %v840 = vld [vmem:[#allocation11 + $0x1c] sm:$0xf]
    %v841 = vld [vmem:[#allocation11 + $0x20] sm:$0xf]
    %v842 = vld [vmem:[#allocation11 + $0x24] sm:$0xf]
    %v843 = vld [vmem:[#allocation11 + $0x28] sm:$0xf]
    %v844 = vld [vmem:[#allocation11 + $0x2c] sm:$0xf]
    %v845 = vld [vmem:[#allocation11 + $0x30] sm:$0xf]
    %v846 = vld [vmem:[#allocation11 + $0x34] sm:$0xf]
    %v847 = vld [vmem:[#allocation11 + $0x38] sm:$0xf]
    %v848 = vld [vmem:[#allocation11 + $0x3c] sm:$0xf]
    %v865 = vunpack.c.l.b16 %v833
    %v866 = vunpack.c.l.b16 %v834
    %v867 = vunpack.c.l.b16 %v835
    %v868 = vunpack.c.l.b16 %v836
    %v869 = vunpack.c.l.b16 %v837
    %v870 = vunpack.c.l.b16 %v838
    %v871 = vunpack.c.l.b16 %v839
    %v872 = vunpack.c.l.b16 %v840
    %v873 = vunpack.c.l.b16 %v841
    %v874 = vunpack.c.l.b16 %v842
    %v875 = vunpack.c.l.b16 %v843
    %v876 = vunpack.c.l.b16 %v844
    %v877 = vunpack.c.l.b16 %v845
    %v878 = vunpack.c.l.b16 %v846
    %v879 = vunpack.c.l.b16 %v847
    %v880 = vunpack.c.l.b16 %v848
    %v881 = vpack.c.b16 %v866, %v865
    %v882 = vpack.c.b16 %v868, %v867
    %v883 = vpack.c.b16 %v870, %v869
    %v884 = vpack.c.b16 %v872, %v871
    %v885 = vpack.c.b16 %v874, %v873
    %v886 = vpack.c.b16 %v876, %v875
    %v887 = vpack.c.b16 %v878, %v877
    %v888 = vpack.c.b16 %v880, %v879
    %897 = vmatprep.subr.bf16.mxu0 0
    %898 = vmatpush1.bf16.msra.mxu0 %v888
    %899 = vmatprep.subr.bf16.mxu0 0
    %900 = vmatpush1.bf16.msra.mxu0 %v887
    %901 = vmatprep.subr.bf16.mxu0 0
    %902 = vmatpush1.bf16.msra.mxu0 %v886
    %903 = vmatprep.subr.bf16.mxu0 0
    %904 = vmatpush1.bf16.msra.mxu0 %v885
    %905 = vmatprep.subr.bf16.mxu0 0
    %906 = vmatpush1.bf16.msra.mxu0 %v884
    %907 = vmatprep.subr.bf16.mxu0 0
    %908 = vmatpush1.bf16.msra.mxu0 %v883
    %909 = vmatprep.subr.bf16.mxu0 0
    %910 = vmatpush1.bf16.msra.mxu0 %v882
    %911 = vmatprep.subr.bf16.mxu0 0
    %912 = vmatpush1.bf16.msra.mxu0 %v881
    %913 = vmatprep.subr.bf16.mxu0 0
    %914 = vmatpush2.bf16.msra.mxu0 0
    %915 = vmatprep.subr.bf16.mxu0 0
    %916 = vmatpush2.bf16.msra.mxu0 0
    %917 = vmatprep.subr.bf16.mxu0 0
    %918 = vmatpush2.bf16.msra.mxu0 0
    %919 = vmatprep.subr.bf16.mxu0 0
    %920 = vmatpush2.bf16.msra.mxu0 0
    %921 = vmatprep.subr.bf16.mxu0 0
    %922 = vmatpush2.bf16.msra.mxu0 0
    %923 = vmatprep.subr.bf16.mxu0 0
    %924 = vmatpush2.bf16.msra.mxu0 0
    %925 = vmatprep.subr.bf16.mxu0 0
    %926 = vmatpush2.bf16.msra.mxu0 0
    %927 = vmatprep.subr.bf16.mxu0 0
    %928 = vmatpush2.bf16.msra.mxu0 0
    %929 = vmatprep.mubr.bf16.mxu0 0
    %930 = vmatmul.mubr.bf16.gmra.mxu0 %v832
    %v931 = vpop.f32.mrf.mxu0
    %v932 = vadd.f32 0.0, %v931
    %v933 = vpop.f32.mrf.mxu0
    %v934 = vpop.f32.mrf.mxu0
    %v935 = vadd.f32 0.0, %v934
    %v936 = vpop.f32.mrf.mxu0
    %937 = vdwg.mxu0
    %v938 = vadd.f32 %v642, %v932
    %v939 = vadd.f32 %v645, %v935
    %v940 = vtanh.pop %v938
    %v941 = vtanh.pop %v939
    %v942 = vsub.f32 1.0, %v813
    %v943 = vsub.f32 1.0, %v815
    %v944 = vmul.f32 %v942, %v124
    %v945 = vmul.f32 %v943, %v125
    %v946 = vmul.f32 %v813, %v940
    %v947 = vmul.f32 %v815, %v941
    %v948 = vadd.f32 %v944, %v946
    %v949 = vadd.f32 %v945, %v947
    %950 = vst [vmem:[#allocation13] sm:$0xff] %v948
    %951 = vst [vmem:[#allocation13 + $0x8] sm:$0xff] %v949
    // Predicated region
    $region70: #{_forward_2d.1} parent=1 // pred_check
      _
    $region71: #{_forward_2d.1} parent=1 // pred_check_branch
      %953 = sbr.rel (0) target = $region73
    $region72: #{_forward_2d.1} parent=1 // pred_region
      %s955 = ssub.s32 256, 256
      %956 = vsyncadd [#allocation4], %s955
      %s957 = sshll.u32 [#allocation13], 4
      %s958 = int_to_ptr.vmem [resolvable:$true] %s957
      %963 = dma.vmem_to_hbm [thread:$0]  %s958, 256, %s11, [#allocation4], 128, 128, 8
    $region73: #{_forward_2d.1} parent=1 // pred_fallthru
      _
    // Predicated region
    $region74: #{_forward_2d.1} parent=1 // pred_check
      _
    $region75: #{_forward_2d.1} parent=1 // pred_check_branch
      %965 = sbr.rel (0) target = $region77
    $region76: #{_forward_2d.1} parent=1 // pred_region
      %966 = dma.done [#allocation4], 256
    $region77: #{_forward_2d.1} parent=1 // pred_fallthru
      _
    %967 = vsyncpa [#allocation3], 1
    %968 = vsyncpa [#allocation6], 1
    %969 = vsyncpa [#allocation9], 1
    %970 = vsyncpa [#allocation12], 1
    %971 = vsyncpa [#allocation4], 1

// kernel: _forward_2d.1
$region0: #{_forward_2d.1}
  #allocation0 [shape = 'u32[]', space=smem, size = 0x4, offset = 0x4, fixed_abs, tag = 'smem constant byte address 0x4 - core index']
  #allocation1 [shape = 'u32[144,128]{1,0:T(1,128)}', space=vmem, size = 0x12000, scoped, tag = 'internal scratch']
  %s0 = inlined_call_operand.hbm [shape: bf16[16,128], index: 0, kind: input, shape index: {}]
  %s1 = inlined_call_operand.vmem [shape: f32[1,128], index: 1, kind: input, shape index: {}]
  %s2 = inlined_call_operand.vmem [shape: f32[1,128], index: 2, kind: input, shape index: {}]
  %s3 = inlined_call_operand.hbm [shape: bf16[128,128], index: 3, kind: input, shape index: {}]
  %s4 = inlined_call_operand.vmem [shape: f32[1,128], index: 4, kind: input, shape index: {}]
  %s5 = inlined_call_operand.hbm [shape: bf16[128,128], index: 5, kind: input, shape index: {}]
  %s6 = inlined_call_operand.vmem [shape: f32[1,128], index: 6, kind: input, shape index: {}]
  %s7 = inlined_call_operand.hbm [shape: bf16[128,384], index: 7, kind: input, shape index: {}]
  %s8 = inlined_call_operand.vmem [shape: f32[1,128], index: 8, kind: input, shape index: {}]
  %s9 = inlined_call_operand.hbm [shape: bf16[128,256], index: 9, kind: input, shape index: {}]
  %s10 = inlined_call_operand.hbm [shape: bf16[128,128], index: 10, kind: input, shape index: {}]
  %s11 = inlined_call_operand.hbm [shape: f32[16,128], index: 11, kind: output, shape index: {}]
  %s12 = sld [smem:[#allocation0]]
  $region78: #{_forward_2d.1} parent=0
    _
  %s14 = ssub.s32 1, %s12
  %s15 = scalar_select 0, %s14, %s12
  $region1: #{_forward_2d.1} parent=0
    #allocation2 [shape = 'u8[4096]{0}', space=vmem, size = 0x1000, scoped, tag = 'input window, operand 0, single buffered']
    #allocation3 [shape = 's32[1]{0}', space=sflag, size = 0x4, scoped, tag = 'scoped memory for _forward_2d.1']
    #allocation4 [shape = 's32[1]{0}', space=sflag, size = 0x4, scoped, tag = 'scoped memory for _forward_2d.1']
    #allocation5 [shape = 'u8[32768]{0}', space=vmem, size = 0x8000, scoped, tag = 'input window, operand 3, single buffered']
    #allocation6 [shape = 's32[1]{0}', space=sflag, size = 0x4, scoped, tag = 'scoped memory for _forward_2d.1']
    #allocation7 [shape = 'u8[32768]{0}', space=vmem, size = 0x8000, scoped, tag = 'input window, operand 5, single buffered']
    #allocation8 [shape = 'u8[98304]{0}', space=vmem, size = 0x18000, scoped, tag = 'input window, operand 7, single buffered']
    #allocation9 [shape = 's32[1]{0}', space=sflag, size = 0x4, scoped, tag = 'scoped memory for _forward_2d.1']
    #allocation10 [shape = 'u8[65536]{0}', space=vmem, size = 0x10000, scoped, tag = 'input window, operand 9, single buffered']
    #allocation11 [shape = 'u8[32768]{0}', space=vmem, size = 0x8000, scoped, tag = 'input window, operand 10, single buffered']
    #allocation12 [shape = 's32[1]{0}', space=sflag, size = 0x4, scoped, tag = 'scoped memory for _forward_2d.1']
    #allocation13 [shape = 'u8[8192]{0}', space=vmem, size = 0x2000, scoped, tag = 'output window, operand 0, single buffered']
    %16 = vsyncpa [#allocation3], 0
    %17 = vsyncpa [#allocation6], 0
    %18 = vsyncpa [#allocation9], 0
    %19 = vsyncpa [#allocation12], 0
    %20 = vsyncpa [#allocation4], 0
    // Predicated region
    $region2: #{_forward_2d.1} parent=1 // pred_check
      _
    $region3: #{_forward_2d.1} parent=1 // pred_check_branch
      %22 = sbr.rel (0) target = $region5
    $region4: #{_forward_2d.1} parent=1 // pred_region
      %s24 = ssub.s32 128, 128
      %25 = vsyncadd [#allocation3], %s24
      %s26 = sshll.u32 [#allocation2], 4
      %s27 = int_to_ptr.vmem [resolvable:$true] %s26
      %32 = dma.hbm_to_vmem [thread:$0]  %s0, 128, %s27, [#allocation3], 64, 64, 4
    $region5: #{_forward_2d.1} parent=1 // pred_fallthru
      _
    // Predicated region
    $region6: #{_forward_2d.1} parent=1 // pred_check
      _
    $region7: #{_forward_2d.1} parent=1 // pred_check_branch
      %34 = sbr.rel (0) target = $region9
    $region8: #{_forward_2d.1} parent=1 // pred_region
      _
    $region9: #{_forward_2d.1} parent=1 // pred_fallthru
      _
    // Predicated region
    $region10: #{_forward_2d.1} parent=1 // pred_check
      _
    $region11: #{_forward_2d.1} parent=1 // pred_check_branch
      %36 = sbr.rel (0) target = $region13
    $region12: #{_forward_2d.1} parent=1 // pred_region
      _
    $region13: #{_forward_2d.1} parent=1 // pred_fallthru
      _
    // Predicated region
    $region14: #{_forward_2d.1} parent=1 // pred_check
      _
    $region15: #{_forward_2d.1} parent=1 // pred_check_branch
      %38 = sbr.rel (0) target = $region17
    $region16: #{_forward_2d.1} parent=1 // pred_region
      %s40 = ssub.s32 1024, 1024
      %41 = vsyncadd [#allocation6], %s40
      %s42 = sshll.u32 [#allocation5], 4
      %s43 = int_to_ptr.vmem [resolvable:$true] %s42
      %48 = dma.hbm_to_vmem [thread:$0]  %s3, 1024, %s43, [#allocation6], 64, 64, 4
    $region17: #{_forward_2d.1} parent=1 // pred_fallthru
      _
    // Predicated region
    $region18: #{_forward_2d.1} parent=1 // pred_check
      _
    $region19: #{_forward_2d.1} parent=1 // pred_check_branch
      %50 = sbr.rel (0) target = $region21
    $region20: #{_forward_2d.1} parent=1 // pred_region
      _
    $region21: #{_forward_2d.1} parent=1 // pred_fallthru
      _
    // Predicated region
    $region22: #{_forward_2d.1} parent=1 // pred_check
      _
    $region23: #{_forward_2d.1} parent=1 // pred_check_branch
      %52 = sbr.rel (0) target = $region25
    $region24: #{_forward_2d.1} parent=1 // pred_region
      %s54 = ssub.s32 1024, 1024
      %55 = vsyncadd [#allocation6], %s54
      %s56 = sshll.u32 [#allocation7], 4
      %s57 = int_to_ptr.vmem [resolvable:$true] %s56
      %62 = dma.hbm_to_vmem [thread:$0]  %s5, 1024, %s57, [#allocation6], 64, 64, 4
    $region25: #{_forward_2d.1} parent=1 // pred_fallthru
      _
    // Predicated region
    $region26: #{_forward_2d.1} parent=1 // pred_check
      _
    $region27: #{_forward_2d.1} parent=1 // pred_check_branch
      %64 = sbr.rel (0) target = $region29
    $region28: #{_forward_2d.1} parent=1 // pred_region
      _
    $region29: #{_forward_2d.1} parent=1 // pred_fallthru
      _
    // Predicated region
    $region30: #{_forward_2d.1} parent=1 // pred_check
      _
    $region31: #{_forward_2d.1} parent=1 // pred_check_branch
      %66 = sbr.rel (0) target = $region33
    $region32: #{_forward_2d.1} parent=1 // pred_region
      %s68 = ssub.s32 3072, 3072
      %69 = vsyncadd [#allocation9], %s68
      %s70 = sshll.u32 [#allocation8], 4
      %s71 = int_to_ptr.vmem [resolvable:$true] %s70
      %76 = dma.hbm_to_vmem [thread:$0]  %s7, 3072, %s71, [#allocation9], 192, 192, 12
    $region33: #{_forward_2d.1} parent=1 // pred_fallthru
      _
    // Predicated region
    $region34: #{_forward_2d.1} parent=1 // pred_check
      _
    $region35: #{_forward_2d.1} parent=1 // pred_check_branch
      %78 = sbr.rel (0) target = $region37
    $region36: #{_forward_2d.1} parent=1 // pred_region
      _
    $region37: #{_forward_2d.1} parent=1 // pred_fallthru
      _
    // Predicated region
    $region38: #{_forward_2d.1} parent=1 // pred_check
      _
    $region39: #{_forward_2d.1} parent=1 // pred_check_branch
      %80 = sbr.rel (0) target = $region41
    $region40: #{_forward_2d.1} parent=1 // pred_region
      %s82 = ssub.s32 2048, 2048
      %83 = vsyncadd [#allocation9], %s82
      %s84 = sshll.u32 [#allocation10], 4
      %s85 = int_to_ptr.vmem [resolvable:$true] %s84
      %90 = dma.hbm_to_vmem [thread:$0]  %s9, 2048, %s85, [#allocation9], 128, 128, 8
    $region41: #{_forward_2d.1} parent=1 // pred_fallthru
      _
    // Predicated region
    $region42: #{_forward_2d.1} parent=1 // pred_check
      _
    $region43: #{_forward_2d.1} parent=1 // pred_check_branch
      %92 = sbr.rel (0) target = $region45
    $region44: #{_forward_2d.1} parent=1 // pred_region
      %s94 = ssub.s32 1024, 1024
      %95 = vsyncadd [#allocation12], %s94
      %s96 = sshll.u32 [#allocation11], 4
      %s97 = int_to_ptr.vmem [resolvable:$true] %s96
      %102 = dma.hbm_to_vmem [thread:$0]  %s10, 1024, %s97, [#allocation12], 64, 64, 4
    $region45: #{_forward_2d.1} parent=1 // pred_fallthru
      _
    // Predicated region
    $region46: #{_forward_2d.1} parent=1 // pred_check
      _
    $region47: #{_forward_2d.1} parent=1 // pred_check_branch
      %104 = sbr.rel (0) target = $region49
    $region48: #{_forward_2d.1} parent=1 // pred_region
      %105 = dma.done [#allocation3], 128
    $region49: #{_forward_2d.1} parent=1 // pred_fallthru
      _
    // Predicated region
    $region50: #{_forward_2d.1} parent=1 // pred_check
      _
    $region51: #{_forward_2d.1} parent=1 // pred_check_branch
      %107 = sbr.rel (0) target = $region53
    $region52: #{_forward_2d.1} parent=1 // pred_region
      %108 = dma.done [#allocation6], 1024
    $region53: #{_forward_2d.1} parent=1 // pred_fallthru
      _
    // Predicated region
    $region54: #{_forward_2d.1} parent=1 // pred_check
      _
    $region55: #{_forward_2d.1} parent=1 // pred_check_branch
      %110 = sbr.rel (0) target = $region57
    $region56: #{_forward_2d.1} parent=1 // pred_region
      %111 = dma.done [#allocation6], 1024
    $region57: #{_forward_2d.1} parent=1 // pred_fallthru
      _
    // Predicated region
    $region58: #{_forward_2d.1} parent=1 // pred_check
      _
    $region59: #{_forward_2d.1} parent=1 // pred_check_branch
      %113 = sbr.rel (0) target = $region61
    $region60: #{_forward_2d.1} parent=1 // pred_region
      %114 = dma.done [#allocation9], 3072
    $region61: #{_forward_2d.1} parent=1 // pred_fallthru
      _
    // Predicated region
    $region62: #{_forward_2d.1} parent=1 // pred_check
      _
    $region63: #{_forward_2d.1} parent=1 // pred_check_branch
      %116 = sbr.rel (0) target = $region65
    $region64: #{_forward_2d.1} parent=1 // pred_region
      %117 = dma.done [#allocation9], 2048
    $region65: #{_forward_2d.1} parent=1 // pred_fallthru
      _
    // Predicated region
    $region66: #{_forward_2d.1} parent=1 // pred_check
      _
    $region67: #{_forward_2d.1} parent=1 // pred_check_branch
      %119 = sbr.rel (0) target = $region69
    $region68: #{_forward_2d.1} parent=1 // pred_region
      %120 = dma.done [#allocation12], 1024
    $region69: #{_forward_2d.1} parent=1 // pred_fallthru
      _
    %v122 = vld [vmem:[#allocation2] sm:$0xf]
    %v123 = vld [vmem:[#allocation2 + $0x4] sm:$0xf]
    %v124 = vunpack.c.l.bf16 %v122
    %v125 = vunpack.c.l.bf16 %v123
    %126 = vadd.xlane.f32.xlu0 %v124
    %v127 = vpop.xlane.xlu0 %126
    %128 = vadd.xlane.f32.xlu0 %v125
    %v129 = vpop.xlane.xlu0 %128
    %v130 = vmul.f32 %v127, 0.03125
    %v131 = vmul.f32 %v129, 0.03125
    %v132 = vsub.f32 %v124, %v130
    %v133 = vsub.f32 %v125, %v131
    %v134 = vlaneseq
    %v135 = vand.u32 %v134, 127
    %vm136 = vcmp.lt.s32.totalorder %v135, 32
    %v137 = vsel %vm136, 1, 0
    %vm138 = vcmp.eq.s32.totalorder %v137, 1
    %v139 = vsel %vm138, %v132, 0.0
    %v140 = vsel %vm138, %v133, 0.0
    %v141 = vmul.f32 %v139, %v139
    %v142 = vmul.f32 %v140, %v140
    %143 = vadd.xlane.f32.xlu0 %v141
    %v144 = vpop.xlane.xlu0 %143
    %145 = vadd.xlane.f32.xlu0 %v142
    %v146 = vpop.xlane.xlu0 %145
    %v147 = vmul.f32 %v144, 0.03125
    %v148 = vmul.f32 %v146, 0.03125
    %v149 = vadd.f32 %v147, 1e-06
    %v150 = vadd.f32 %v148, 1e-06
    %v151 = vrsqrt.pop %v149
    %v152 = vrsqrt.pop %v150
    %v153 = vmul.f32 %v139, %v151
    %v154 = vmul.f32 %v140, %v152
    %v155 = vld [vmem:[%s1] sm:$0x1]
    %v157 = vlaneseq
    %v158 = vshrl.u32 %v157, 7
    %v159 = vsub.s32 0, %v158
    %v160 = vrot.slane %v155, %v159
    %v162 = vmul.f32 %v153, %v160
    %v163 = vmul.f32 %v154, %v160
    %v164 = vld [vmem:[%s2] sm:$0x1]
    %v166 = vlaneseq
    %v167 = vshrl.u32 %v166, 7
    %v168 = vsub.s32 0, %v167
    %v169 = vrot.slane %v164, %v168
    %v171 = vadd.f32 %v162, %v169
    %v172 = vadd.f32 %v163, %v169
    %v173 = vpack.c.bf16 %v172, %v171
    %v174 = vld [vmem:[#allocation5] sm:$0xf]
    %v175 = vld [vmem:[#allocation5 + $0x4] sm:$0xf]
    %v176 = vld [vmem:[#allocation5 + $0x8] sm:$0xf]
    %v177 = vld [vmem:[#allocation5 + $0xc] sm:$0xf]
    %v178 = vld [vmem:[#allocation5 + $0x10] sm:$0xf]
    %v179 = vld [vmem:[#allocation5 + $0x14] sm:$0xf]
    %v180 = vld [vmem:[#allocation5 + $0x18] sm:$0xf]
    %v181 = vld [vmem:[#allocation5 + $0x1c] sm:$0xf]
    %v182 = vld [vmem:[#allocation5 + $0x20] sm:$0xf]
    %v183 = vld [vmem:[#allocation5 + $0x24] sm:$0xf]
    %v184 = vld [vmem:[#allocation5 + $0x28] sm:$0xf]
    %v185 = vld [vmem:[#allocation5 + $0x2c] sm:$0xf]
    %v186 = vld [vmem:[#allocation5 + $0x30] sm:$0xf]
    %v187 = vld [vmem:[#allocation5 + $0x34] sm:$0xf]
    %v188 = vld [vmem:[#allocation5 + $0x38] sm:$0xf]
    %v189 = vld [vmem:[#allocation5 + $0x3c] sm:$0xf]
    %v190 = vld [vmem:[%s4] sm:$0x1]
    %v192 = vlaneseq
    %v193 = vshrl.u32 %v192, 7
    %v194 = vsub.s32 0, %v193
    %v195 = vrot.slane %v190, %v194
    %v213 = vunpack.c.l.b16 %v174
    %v214 = vunpack.c.l.b16 %v175
    %v215 = vunpack.c.l.b16 %v176
    %v216 = vunpack.c.l.b16 %v177
    %v217 = vunpack.c.l.b16 %v178
    %v218 = vunpack.c.l.b16 %v179
    %v219 = vunpack.c.l.b16 %v180
    %v220 = vunpack.c.l.b16 %v181
    %v221 = vunpack.c.l.b16 %v182
    %v222 = vunpack.c.l.b16 %v183
    %v223 = vunpack.c.l.b16 %v184
    %v224 = vunpack.c.l.b16 %v185
    %v225 = vunpack.c.l.b16 %v186
    %v226 = vunpack.c.l.b16 %v187
    %v227 = vunpack.c.l.b16 %v188
    %v228 = vunpack.c.l.b16 %v189
    %v229 = vpack.c.b16 %v214, %v213
    %v230 = vpack.c.b16 %v216, %v215
    %v231 = vpack.c.b16 %v218, %v217
    %v232 = vpack.c.b16 %v220, %v219
    %v233 = vpack.c.b16 %v222, %v221
    %v234 = vpack.c.b16 %v224, %v223
    %v235 = vpack.c.b16 %v226, %v225
    %v236 = vpack.c.b16 %v228, %v227
    %245 = vmatprep.subr.bf16.mxu0 0
    %246 = vmatpush1.bf16.msra.mxu0 %v236
    %247 = vmatprep.subr.bf16.mxu0 0
    %248 = vmatpush1.bf16.msra.mxu0 %v235
    %249 = vmatprep.subr.bf16.mxu0 0
    %250 = vmatpush1.bf16.msra.mxu0 %v234
    %251 = vmatprep.subr.bf16.mxu0 0
    %252 = vmatpush1.bf16.msra.mxu0 %v233
    %253 = vmatprep.subr.bf16.mxu0 0
    %254 = vmatpush1.bf16.msra.mxu0 %v232
    %255 = vmatprep.subr.bf16.mxu0 0
    %256 = vmatpush1.bf16.msra.mxu0 %v231
    %257 = vmatprep.subr.bf16.mxu0 0
    %258 = vmatpush1.bf16.msra.mxu0 %v230
    %259 = vmatprep.subr.bf16.mxu0 0
    %260 = vmatpush1.bf16.msra.mxu0 %v229
    %261 = vmatprep.subr.bf16.mxu0 0
    %262 = vmatpush2.bf16.msra.mxu0 0
    %263 = vmatprep.subr.bf16.mxu0 0
    %264 = vmatpush2.bf16.msra.mxu0 0
    %265 = vmatprep.subr.bf16.mxu0 0
    %266 = vmatpush2.bf16.msra.mxu0 0
    %267 = vmatprep.subr.bf16.mxu0 0
    %268 = vmatpush2.bf16.msra.mxu0 0
    %269 = vmatprep.subr.bf16.mxu0 0
    %270 = vmatpush2.bf16.msra.mxu0 0
    %271 = vmatprep.subr.bf16.mxu0 0
    %272 = vmatpush2.bf16.msra.mxu0 0
    %273 = vmatprep.subr.bf16.mxu0 0
    %274 = vmatpush2.bf16.msra.mxu0 0
    %275 = vmatprep.subr.bf16.mxu0 0
    %276 = vmatpush2.bf16.msra.mxu0 0
    %277 = vmatprep.mubr.bf16.mxu0 0
    %278 = vmatmul.mubr.bf16.gmra.mxu0 %v173
    %v279 = vpop.f32.mrf.mxu0
    %v280 = vadd.f32 %v195, %v279
    %v281 = vpop.f32.mrf.mxu0
    %v282 = vpop.f32.mrf.mxu0
    %v283 = vadd.f32 %v195, %v282
    %v284 = vpop.f32.mrf.mxu0
    %285 = vdwg.mxu0
    %v286 = vmax.f32 %v280, 0.0
    %v287 = vmax.f32 %v283, 0.0
    %v288 = vpack.c.bf16 %v287, %v286
    %v289 = vld [vmem:[#allocation7] sm:$0xf]
    %v290 = vld [vmem:[#allocation7 + $0x4] sm:$0xf]
    %v291 = vld [vmem:[#allocation7 + $0x8] sm:$0xf]
    %v292 = vld [vmem:[#allocation7 + $0xc] sm:$0xf]
    %v293 = vld [vmem:[#allocation7 + $0x10] sm:$0xf]
    %v294 = vld [vmem:[#allocation7 + $0x14] sm:$0xf]
    %v295 = vld [vmem:[#allocation7 + $0x18] sm:$0xf]
    %v296 = vld [vmem:[#allocation7 + $0x1c] sm:$0xf]
    %v297 = vld [vmem:[#allocation7 + $0x20] sm:$0xf]
    %v298 = vld [vmem:[#allocation7 + $0x24] sm:$0xf]
    %v299 = vld [vmem:[#allocation7 + $0x28] sm:$0xf]
    %v300 = vld [vmem:[#allocation7 + $0x2c] sm:$0xf]
    %v301 = vld [vmem:[#allocation7 + $0x30] sm:$0xf]
    %v302 = vld [vmem:[#allocation7 + $0x34] sm:$0xf]
    %v303 = vld [vmem:[#allocation7 + $0x38] sm:$0xf]
    %v304 = vld [vmem:[#allocation7 + $0x3c] sm:$0xf]
    %v305 = vld [vmem:[%s6] sm:$0x1]
    %v307 = vlaneseq
    %v308 = vshrl.u32 %v307, 7
    %v309 = vsub.s32 0, %v308
    %v310 = vrot.slane %v305, %v309
    %v328 = vunpack.c.l.b16 %v289
    %v329 = vunpack.c.l.b16 %v290
    %v330 = vunpack.c.l.b16 %v291
    %v331 = vunpack.c.l.b16 %v292
    %v332 = vunpack.c.l.b16 %v293
    %v333 = vunpack.c.l.b16 %v294
    %v334 = vunpack.c.l.b16 %v295
    %v335 = vunpack.c.l.b16 %v296
    %v336 = vunpack.c.l.b16 %v297
    %v337 = vunpack.c.l.b16 %v298
    %v338 = vunpack.c.l.b16 %v299
    %v339 = vunpack.c.l.b16 %v300
    %v340 = vunpack.c.l.b16 %v301
    %v341 = vunpack.c.l.b16 %v302
    %v342 = vunpack.c.l.b16 %v303
    %v343 = vunpack.c.l.b16 %v304
    %v344 = vpack.c.b16 %v329, %v328
    %v345 = vpack.c.b16 %v331, %v330
    %v346 = vpack.c.b16 %v333, %v332
    %v347 = vpack.c.b16 %v335, %v334
    %v348 = vpack.c.b16 %v337, %v336
    %v349 = vpack.c.b16 %v339, %v338
    %v350 = vpack.c.b16 %v341, %v340
    %v351 = vpack.c.b16 %v343, %v342
    %360 = vmatprep.subr.bf16.mxu0 0
    %361 = vmatpush1.bf16.msra.mxu0 %v351
    %362 = vmatprep.subr.bf16.mxu0 0
    %363 = vmatpush1.bf16.msra.mxu0 %v350
    %364 = vmatprep.subr.bf16.mxu0 0
    %365 = vmatpush1.bf16.msra.mxu0 %v349
    %366 = vmatprep.subr.bf16.mxu0 0
    %367 = vmatpush1.bf16.msra.mxu0 %v348
    %368 = vmatprep.subr.bf16.mxu0 0
    %369 = vmatpush1.bf16.msra.mxu0 %v347
    %370 = vmatprep.subr.bf16.mxu0 0
    %371 = vmatpush1.bf16.msra.mxu0 %v346
    %372 = vmatprep.subr.bf16.mxu0 0
    %373 = vmatpush1.bf16.msra.mxu0 %v345
    %374 = vmatprep.subr.bf16.mxu0 0
    %375 = vmatpush1.bf16.msra.mxu0 %v344
    %376 = vmatprep.subr.bf16.mxu0 0
    %377 = vmatpush2.bf16.msra.mxu0 0
    %378 = vmatprep.subr.bf16.mxu0 0
    %379 = vmatpush2.bf16.msra.mxu0 0
    %380 = vmatprep.subr.bf16.mxu0 0
    %381 = vmatpush2.bf16.msra.mxu0 0
    %382 = vmatprep.subr.bf16.mxu0 0
    %383 = vmatpush2.bf16.msra.mxu0 0
    %384 = vmatprep.subr.bf16.mxu0 0
    %385 = vmatpush2.bf16.msra.mxu0 0
    %386 = vmatprep.subr.bf16.mxu0 0
    %387 = vmatpush2.bf16.msra.mxu0 0
    %388 = vmatprep.subr.bf16.mxu0 0
    %389 = vmatpush2.bf16.msra.mxu0 0
    %390 = vmatprep.subr.bf16.mxu0 0
    %391 = vmatpush2.bf16.msra.mxu0 0
    %392 = vmatprep.mubr.bf16.mxu0 0
    %393 = vmatmul.mubr.bf16.gmra.mxu0 %v288
    %v394 = vpop.f32.mrf.mxu0
    %v395 = vadd.f32 %v310, %v394
    %v396 = vpop.f32.mrf.mxu0
    %v397 = vpop.f32.mrf.mxu0
    %v398 = vadd.f32 %v310, %v397
    %v399 = vpop.f32.mrf.mxu0
    %400 = vdwg.mxu0
    %v401 = vmax.f32 %v395, 0.0
    %v402 = vmax.f32 %v398, 0.0
    %v403 = vpack.c.bf16 %v402, %v401
    %v404 = vld [vmem:[#allocation8] sm:$0xff]
    %v405 = vld [vmem:[#allocation8 + $0x8] sm:$0xf]
    %v406 = vld [vmem:[#allocation8 + $0xc] sm:$0xff]
    %v407 = vld [vmem:[#allocation8 + $0x14] sm:$0xf]
    %v408 = vld [vmem:[#allocation8 + $0x18] sm:$0xff]
    %v409 = vld [vmem:[#allocation8 + $0x20] sm:$0xf]
    %v410 = vld [vmem:[#allocation8 + $0x24] sm:$0xff]
    %v411 = vld [vmem:[#allocation8 + $0x2c] sm:$0xf]
    %v412 = vld [vmem:[#allocation8 + $0x30] sm:$0xff]
    %v413 = vld [vmem:[#allocation8 + $0x38] sm:$0xf]
    %v414 = vld [vmem:[#allocation8 + $0x3c] sm:$0xff]
    %v415 = vld [vmem:[#allocation8 + $0x44] sm:$0xf]
    %v416 = vld [vmem:[#allocation8 + $0x48] sm:$0xff]
    %v417 = vld [vmem:[#allocation8 + $0x50] sm:$0xf]
    %v418 = vld [vmem:[#allocation8 + $0x54] sm:$0xff]
    %v419 = vld [vmem:[#allocation8 + $0x5c] sm:$0xf]
    %v420 = vld [vmem:[#allocation8 + $0x60] sm:$0xff]
    %v421 = vld [vmem:[#allocation8 + $0x68] sm:$0xf]
    %v422 = vld [vmem:[#allocation8 + $0x6c] sm:$0xff]
    %v423 = vld [vmem:[#allocation8 + $0x74] sm:$0xf]
    %v424 = vld [vmem:[#allocation8 + $0x78] sm:$0xff]
    %v425 = vld [vmem:[#allocation8 + $0x80] sm:$0xf]
    %v426 = vld [vmem:[#allocation8 + $0x84] sm:$0xff]
    %v427 = vld [vmem:[#allocation8 + $0x8c] sm:$0xf]
    %v428 = vld [vmem:[#allocation8 + $0x90] sm:$0xff]
    %v429 = vld [vmem:[#allocation8 + $0x98] sm:$0xf]
    %v430 = vld [vmem:[#allocation8 + $0x9c] sm:$0xff]
    %v431 = vld [vmem:[#allocation8 + $0xa4] sm:$0xf]
    %v432 = vld [vmem:[#allocation8 + $0xa8] sm:$0xff]
    %v433 = vld [vmem:[#allocation8 + $0xb0] sm:$0xf]
    %v434 = vld [vmem:[#allocation8 + $0xb4] sm:$0xff]
    %v435 = vld [vmem:[#allocation8 + $0xbc] sm:$0xf]
    %v468 = vunpack.c.l.b16 %v404
    %v469 = vunpack.c.h.b16 %v404
    %v470 = vunpack.c.l.b16 %v405
    %v471 = vunpack.c.l.b16 %v406
    %v472 = vunpack.c.h.b16 %v406
    %v473 = vunpack.c.l.b16 %v407
    %v474 = vunpack.c.l.b16 %v408
    %v475 = vunpack.c.h.b16 %v408
    %v476 = vunpack.c.l.b16 %v409
    %v477 = vunpack.c.l.b16 %v410
    %v478 = vunpack.c.h.b16 %v410
    %v479 = vunpack.c.l.b16 %v411
    %v480 = vunpack.c.l.b16 %v412
    %v481 = vunpack.c.h.b16 %v412
    %v482 = vunpack.c.l.b16 %v413
    %v483 = vunpack.c.l.b16 %v414
    %v484 = vunpack.c.h.b16 %v414
    %v485 = vunpack.c.l.b16 %v415
    %v486 = vunpack.c.l.b16 %v416
    %v487 = vunpack.c.h.b16 %v416
    %v488 = vunpack.c.l.b16 %v417
    %v489 = vunpack.c.l.b16 %v418
    %v490 = vunpack.c.h.b16 %v418
    %v491 = vunpack.c.l.b16 %v419
    %v492 = vunpack.c.l.b16 %v420
    %v493 = vunpack.c.h.b16 %v420
    %v494 = vunpack.c.l.b16 %v421
    %v495 = vunpack.c.l.b16 %v422
    %v496 = vunpack.c.h.b16 %v422
    %v497 = vunpack.c.l.b16 %v423
    %v498 = vunpack.c.l.b16 %v424
    %v499 = vunpack.c.h.b16 %v424
    %v500 = vunpack.c.l.b16 %v425
    %v501 = vunpack.c.l.b16 %v426
    %v502 = vunpack.c.h.b16 %v426
    %v503 = vunpack.c.l.b16 %v427
    %v504 = vunpack.c.l.b16 %v428
    %v505 = vunpack.c.h.b16 %v428
    %v506 = vunpack.c.l.b16 %v429
    %v507 = vunpack.c.l.b16 %v430
    %v508 = vunpack.c.h.b16 %v430
    %v509 = vunpack.c.l.b16 %v431
    %v510 = vunpack.c.l.b16 %v432
    %v511 = vunpack.c.h.b16 %v432
    %v512 = vunpack.c.l.b16 %v433
    %v513 = vunpack.c.l.b16 %v434
    %v514 = vunpack.c.h.b16 %v434
    %v515 = vunpack.c.l.b16 %v435
    %v516 = vpack.c.b16 %v471, %v468
    %v517 = vpack.c.b16 %v472, %v469
    %v518 = vpack.c.b16 %v473, %v470
    %v519 = vpack.c.b16 %v477, %v474
    %v520 = vpack.c.b16 %v478, %v475
    %v521 = vpack.c.b16 %v479, %v476
    %v522 = vpack.c.b16 %v483, %v480
    %v523 = vpack.c.b16 %v484, %v481
    %v524 = vpack.c.b16 %v485, %v482
    %v525 = vpack.c.b16 %v489, %v486
    %v526 = vpack.c.b16 %v490, %v487
    %v527 = vpack.c.b16 %v491, %v488
    %v528 = vpack.c.b16 %v495, %v492
    %v529 = vpack.c.b16 %v496, %v493
    %v530 = vpack.c.b16 %v497, %v494
    %v531 = vpack.c.b16 %v501, %v498
    %v532 = vpack.c.b16 %v502, %v499
    %v533 = vpack.c.b16 %v503, %v500
    %v534 = vpack.c.b16 %v507, %v504
    %v535 = vpack.c.b16 %v508, %v505
    %v536 = vpack.c.b16 %v509, %v506
    %v537 = vpack.c.b16 %v513, %v510
    %v538 = vpack.c.b16 %v514, %v511
    %v539 = vpack.c.b16 %v515, %v512
    %564 = vmatprep.subr.bf16.mxu0 %v538
    %565 = vmatpush1.bf16.msra.mxu0 %v537
    %566 = vmatprep.subr.bf16.mxu0 %v535
    %567 = vmatpush1.bf16.msra.mxu0 %v534
    %568 = vmatprep.subr.bf16.mxu0 %v532
    %569 = vmatpush1.bf16.msra.mxu0 %v531
    %570 = vmatprep.subr.bf16.mxu0 %v529
    %571 = vmatpush1.bf16.msra.mxu0 %v528
    %572 = vmatprep.subr.bf16.mxu0 %v526
    %573 = vmatpush1.bf16.msra.mxu0 %v525
    %574 = vmatprep.subr.bf16.mxu0 %v523
    %575 = vmatpush1.bf16.msra.mxu0 %v522
    %576 = vmatprep.subr.bf16.mxu0 %v520
    %577 = vmatpush1.bf16.msra.mxu0 %v519
    %578 = vmatprep.subr.bf16.mxu0 %v517
    %579 = vmatpush1.bf16.msra.mxu0 %v516
    %580 = vmatprep.subr.bf16.mxu0 0
    %581 = vmatpush2.bf16.msra.mxu0 0
    %582 = vmatprep.subr.bf16.mxu0 0
    %583 = vmatpush2.bf16.msra.mxu0 0
    %584 = vmatprep.subr.bf16.mxu0 0
    %585 = vmatpush2.bf16.msra.mxu0 0
    %586 = vmatprep.subr.bf16.mxu0 0
    %587 = vmatpush2.bf16.msra.mxu0 0
    %588 = vmatprep.subr.bf16.mxu0 0
    %589 = vmatpush2.bf16.msra.mxu0 0
    %590 = vmatprep.subr.bf16.mxu0 0
    %591 = vmatpush2.bf16.msra.mxu0 0
    %592 = vmatprep.subr.bf16.mxu0 0
    %593 = vmatpush2.bf16.msra.mxu0 0
    %594 = vmatprep.subr.bf16.mxu0 0
    %595 = vmatpush2.bf16.msra.mxu0 0
    %596 = vmatprep.mubr.bf16.mxu0 0
    %597 = vmatmul.mubr.bf16.gmra.mxu0 %v403
    %v598 = vpop.f32.mrf.mxu0
    %v599 = vadd.f32 0.0, %v598
    %v600 = vpop.f32.mrf.mxu0
    %v601 = vadd.f32 0.0, %v600
    %v602 = vpop.f32.mrf.mxu0
    %v603 = vadd.f32 0.0, %v602
    %v604 = vpop.f32.mrf.mxu0
    %v605 = vadd.f32 0.0, %v604
    %606 = vdwg.mxu0
    %607 = vmatprep.subr.bf16.mxu0 0
    %608 = vmatpush1.bf16.msra.mxu0 %v539
    %609 = vmatprep.subr.bf16.mxu0 0
    %610 = vmatpush1.bf16.msra.mxu0 %v536
    %611 = vmatprep.subr.bf16.mxu0 0
    %612 = vmatpush1.bf16.msra.mxu0 %v533
    %613 = vmatprep.subr.bf16.mxu0 0
    %614 = vmatpush1.bf16.msra.mxu0 %v530
    %615 = vmatprep.subr.bf16.mxu0 0
    %616 = vmatpush1.bf16.msra.mxu0 %v527
    %617 = vmatprep.subr.bf16.mxu0 0
    %618 = vmatpush1.bf16.msra.mxu0 %v524
    %619 = vmatprep.subr.bf16.mxu0 0
    %620 = vmatpush1.bf16.msra.mxu0 %v521
    %621 = vmatprep.subr.bf16.mxu0 0
    %622 = vmatpush1.bf16.msra.mxu0 %v518
    %623 = vmatprep.subr.bf16.mxu0 0
    %624 = vmatpush2.bf16.msra.mxu0 0
    %625 = vmatprep.subr.bf16.mxu0 0
    %626 = vmatpush2.bf16.msra.mxu0 0
    %627 = vmatprep.subr.bf16.mxu0 0
    %628 = vmatpush2.bf16.msra.mxu0 0
    %629 = vmatprep.subr.bf16.mxu0 0
    %630 = vmatpush2.bf16.msra.mxu0 0
    %631 = vmatprep.subr.bf16.mxu0 0
    %632 = vmatpush2.bf16.msra.mxu0 0
    %633 = vmatprep.subr.bf16.mxu0 0
    %634 = vmatpush2.bf16.msra.mxu0 0
    %635 = vmatprep.subr.bf16.mxu0 0
    %636 = vmatpush2.bf16.msra.mxu0 0
    %637 = vmatprep.subr.bf16.mxu0 0
    %638 = vmatpush2.bf16.msra.mxu0 0
    %639 = vmatprep.mubr.bf16.mxu0 0
    %640 = vmatmul.mubr.bf16.gmra.mxu0 %v403
    %v641 = vpop.f32.mrf.mxu0
    %v642 = vadd.f32 0.0, %v641
    %v643 = vpop.f32.mrf.mxu0
    %v644 = vpop.f32.mrf.mxu0
    %v645 = vadd.f32 0.0, %v644
    %v646 = vpop.f32.mrf.mxu0
    %647 = vdwg.mxu0
    %v648 = vld [vmem:[#allocation10] sm:$0xff]
    %v649 = vld [vmem:[#allocation10 + $0x8] sm:$0xff]
    %v650 = vld [vmem:[#allocation10 + $0x10] sm:$0xff]
    %v651 = vld [vmem:[#allocation10 + $0x18] sm:$0xff]
    %v652 = vld [vmem:[#allocation10 + $0x20] sm:$0xff]
    %v653 = vld [vmem:[#allocation10 + $0x28] sm:$0xff]
    %v654 = vld [vmem:[#allocation10 + $0x30] sm:$0xff]
    %v655 = vld [vmem:[#allocation10 + $0x38] sm:$0xff]
    %v656 = vld [vmem:[#allocation10 + $0x40] sm:$0xff]
    %v657 = vld [vmem:[#allocation10 + $0x48] sm:$0xff]
    %v658 = vld [vmem:[#allocation10 + $0x50] sm:$0xff]
    %v659 = vld [vmem:[#allocation10 + $0x58] sm:$0xff]
    %v660 = vld [vmem:[#allocation10 + $0x60] sm:$0xff]
    %v661 = vld [vmem:[#allocation10 + $0x68] sm:$0xff]
    %v662 = vld [vmem:[#allocation10 + $0x70] sm:$0xff]
    %v663 = vld [vmem:[#allocation10 + $0x78] sm:$0xff]
    %v666 = vunpack.c.l.b16 %v122
    %v667 = vunpack.c.l.b16 %v123
    %v668 = vpack.c.b16 %v667, %v666
    %v686 = vunpack.c.l.b16 %v648
    %v687 = vunpack.c.h.b16 %v648
    %v688 = vunpack.c.l.b16 %v649
    %v689 = vunpack.c.h.b16 %v649
    %v690 = vunpack.c.l.b16 %v650
    %v691 = vunpack.c.h.b16 %v650
    %v692 = vunpack.c.l.b16 %v651
    %v693 = vunpack.c.h.b16 %v651
    %v694 = vunpack.c.l.b16 %v652
    %v695 = vunpack.c.h.b16 %v652
    %v696 = vunpack.c.l.b16 %v653
    %v697 = vunpack.c.h.b16 %v653
    %v698 = vunpack.c.l.b16 %v654
    %v699 = vunpack.c.h.b16 %v654
    %v700 = vunpack.c.l.b16 %v655
    %v701 = vunpack.c.h.b16 %v655
    %v702 = vunpack.c.l.b16 %v656
    %v703 = vunpack.c.h.b16 %v656
    %v704 = vunpack.c.l.b16 %v657
    %v705 = vunpack.c.h.b16 %v657
    %v706 = vunpack.c.l.b16 %v658
    %v707 = vunpack.c.h.b16 %v658
    %v708 = vunpack.c.l.b16 %v659
    %v709 = vunpack.c.h.b16 %v659
    %v710 = vunpack.c.l.b16 %v660
    %v711 = vunpack.c.h.b16 %v660
    %v712 = vunpack.c.l.b16 %v661
    %v713 = vunpack.c.h.b16 %v661
    %v714 = vunpack.c.l.b16 %v662
    %v715 = vunpack.c.h.b16 %v662
    %v716 = vunpack.c.l.b16 %v663
    %v717 = vunpack.c.h.b16 %v663
    %v718 = vpack.c.b16 %v688, %v686
    %v719 = vpack.c.b16 %v689, %v687
    %v720 = vpack.c.b16 %v692, %v690
    %v721 = vpack.c.b16 %v693, %v691
    %v722 = vpack.c.b16 %v696, %v694
    %v723 = vpack.c.b16 %v697, %v695
    %v724 = vpack.c.b16 %v700, %v698
    %v725 = vpack.c.b16 %v701, %v699
    %v726 = vpack.c.b16 %v704, %v702
    %v727 = vpack.c.b16 %v705, %v703
    %v728 = vpack.c.b16 %v708, %v706
    %v729 = vpack.c.b16 %v709, %v707
    %v730 = vpack.c.b16 %v712, %v710
    %v731 = vpack.c.b16 %v713, %v711
    %v732 = vpack.c.b16 %v716, %v714
    %v733 = vpack.c.b16 %v717, %v715
    %750 = vmatprep.subr.bf16.mxu0 %v733
    %751 = vmatpush1.bf16.msra.mxu0 %v732
    %752 = vmatprep.subr.bf16.mxu0 %v731
    %753 = vmatpush1.bf16.msra.mxu0 %v730
    %754 = vmatprep.subr.bf16.mxu0 %v729
    %755 = vmatpush1.bf16.msra.mxu0 %v728
    %756 = vmatprep.subr.bf16.mxu0 %v727
    %757 = vmatpush1.bf16.msra.mxu0 %v726
    %758 = vmatprep.subr.bf16.mxu0 %v725
    %759 = vmatpush1.bf16.msra.mxu0 %v724
    %760 = vmatprep.subr.bf16.mxu0 %v723
    %761 = vmatpush1.bf16.msra.mxu0 %v722
    %762 = vmatprep.subr.bf16.mxu0 %v721
    %763 = vmatpush1.bf16.msra.mxu0 %v720
    %764 = vmatprep.subr.bf16.mxu0 %v719
    %765 = vmatpush1.bf16.msra.mxu0 %v718
    %766 = vmatprep.subr.bf16.mxu0 0
    %767 = vmatpush2.bf16.msra.mxu0 0
    %768 = vmatprep.subr.bf16.mxu0 0
    %769 = vmatpush2.bf16.msra.mxu0 0
    %770 = vmatprep.subr.bf16.mxu0 0
    %771 = vmatpush2.bf16.msra.mxu0 0
    %772 = vmatprep.subr.bf16.mxu0 0
    %773 = vmatpush2.bf16.msra.mxu0 0
    %774 = vmatprep.subr.bf16.mxu0 0
    %775 = vmatpush2.bf16.msra.mxu0 0
    %776 = vmatprep.subr.bf16.mxu0 0
    %777 = vmatpush2.bf16.msra.mxu0 0
    %778 = vmatprep.subr.bf16.mxu0 0
    %779 = vmatpush2.bf16.msra.mxu0 0
    %780 = vmatprep.subr.bf16.mxu0 0
    %781 = vmatpush2.bf16.msra.mxu0 0
    %782 = vmatprep.mubr.bf16.mxu0 0
    %783 = vmatmul.mubr.bf16.gmra.mxu0 %v668
    %v784 = vpop.f32.mrf.mxu0
    %v785 = vadd.f32 0.0, %v784
    %v786 = vpop.f32.mrf.mxu0
    %v787 = vadd.f32 0.0, %v786
    %v788 = vpop.f32.mrf.mxu0
    %v789 = vadd.f32 0.0, %v788
    %v790 = vpop.f32.mrf.mxu0
    %v791 = vadd.f32 0.0, %v790
    %792 = vdwg.mxu0
    %v793 = vld [vmem:[%s8] sm:$0x1]
    %v795 = vlaneseq
    %v796 = vshrl.u32 %v795, 7
    %v797 = vsub.s32 0, %v796
    %v798 = vrot.slane %v793, %v797
    %v800 = vadd.f32 %v599, %v798
    %v801 = vadd.f32 %v603, %v798
    %v802 = vadd.f32 %v800, %v785
    %v803 = vadd.f32 %v801, %v789
    %v804 = vxor.u32 %v802, 2147483648
    %v805 = vxor.u32 %v803, 2147483648
    %v806 = vmul.f32 %v804, 1.442695
    %v807 = vpow.pop %v806
    %v808 = vmul.f32 %v805, 1.442695
    %v809 = vpow.pop %v808
    %v810 = vadd.f32 %v807, 1.0
    %v811 = vadd.f32 %v809, 1.0
    %v812 = vrcp.pop %v810
    %v813 = vmul.f32 1.0, %v812
    %v814 = vrcp.pop %v811
    %v815 = vmul.f32 1.0, %v814
    %v816 = vadd.f32 %v601, %v787
    %v817 = vadd.f32 %v605, %v791
    %v818 = vxor.u32 %v816, 2147483648
    %v819 = vxor.u32 %v817, 2147483648
    %v820 = vmul.f32 %v818, 1.442695
    %v821 = vpow.pop %v820
    %v822 = vmul.f32 %v819, 1.442695
    %v823 = vpow.pop %v822
    %v824 = vadd.f32 %v821, 1.0
    %v825 = vadd.f32 %v823, 1.0
    %v826 = vrcp.pop %v824
    %v827 = vmul.f32 1.0, %v826
    %v828 = vrcp.pop %v825
    %v829 = vmul.f32 1.0, %v828
    %v830 = vmul.f32 %v827, %v124
    %v831 = vmul.f32 %v829, %v125
    %v832 = vpack.c.bf16 %v831, %v830
    %v833 = vld [vmem:[#allocation11] sm:$0xf]
    %v834 = vld [vmem:[#allocation11 + $0x4] sm:$0xf]
    %v835 = vld [vmem:[#allocation11 + $0x8] sm:$0xf]
    %v836 = vld [vmem:[#allocation11 + $0xc] sm:$0xf]
    %v837 = vld [vmem:[#allocation11 + $0x10] sm:$0xf]
    %v838 = vld [vmem:[#allocation11 + $0x14] sm:$0xf]
    %v839 = vld [vmem:[#allocation11 + $0x18] sm:$0xf]
    %v840 = vld [vmem:[#allocation11 + $0x1c] sm:$0xf]
    %v841 = vld [vmem:[#allocation11 + $0x20] sm:$0xf]
    %v842 = vld [vmem:[#allocation11 + $0x24] sm:$0xf]
    %v843 = vld [vmem:[#allocation11 + $0x28] sm:$0xf]
    %v844 = vld [vmem:[#allocation11 + $0x2c] sm:$0xf]
    %v845 = vld [vmem:[#allocation11 + $0x30] sm:$0xf]
    %v846 = vld [vmem:[#allocation11 + $0x34] sm:$0xf]
    %v847 = vld [vmem:[#allocation11 + $0x38] sm:$0xf]
    %v848 = vld [vmem:[#allocation11 + $0x3c] sm:$0xf]
    %v865 = vunpack.c.l.b16 %v833
    %v866 = vunpack.c.l.b16 %v834
    %v867 = vunpack.c.l.b16 %v835
    %v868 = vunpack.c.l.b16 %v836
    %v869 = vunpack.c.l.b16 %v837
    %v870 = vunpack.c.l.b16 %v838
    %v871 = vunpack.c.l.b16 %v839
    %v872 = vunpack.c.l.b16 %v840
    %v873 = vunpack.c.l.b16 %v841
    %v874 = vunpack.c.l.b16 %v842
    %v875 = vunpack.c.l.b16 %v843
    %v876 = vunpack.c.l.b16 %v844
    %v877 = vunpack.c.l.b16 %v845
    %v878 = vunpack.c.l.b16 %v846
    %v879 = vunpack.c.l.b16 %v847
    %v880 = vunpack.c.l.b16 %v848
    %v881 = vpack.c.b16 %v866, %v865
    %v882 = vpack.c.b16 %v868, %v867
    %v883 = vpack.c.b16 %v870, %v869
    %v884 = vpack.c.b16 %v872, %v871
    %v885 = vpack.c.b16 %v874, %v873
    %v886 = vpack.c.b16 %v876, %v875
    %v887 = vpack.c.b16 %v878, %v877
    %v888 = vpack.c.b16 %v880, %v879
    %897 = vmatprep.subr.bf16.mxu0 0
    %898 = vmatpush1.bf16.msra.mxu0 %v888
    %899 = vmatprep.subr.bf16.mxu0 0
    %900 = vmatpush1.bf16.msra.mxu0 %v887
    %901 = vmatprep.subr.bf16.mxu0 0
    %902 = vmatpush1.bf16.msra.mxu0 %v886
    %903 = vmatprep.subr.bf16.mxu0 0
    %904 = vmatpush1.bf16.msra.mxu0 %v885
    %905 = vmatprep.subr.bf16.mxu0 0
    %906 = vmatpush1.bf16.msra.mxu0 %v884
    %907 = vmatprep.subr.bf16.mxu0 0
    %908 = vmatpush1.bf16.msra.mxu0 %v883
    %909 = vmatprep.subr.bf16.mxu0 0
    %910 = vmatpush1.bf16.msra.mxu0 %v882
    %911 = vmatprep.subr.bf16.mxu0 0
    %912 = vmatpush1.bf16.msra.mxu0 %v881
    %913 = vmatprep.subr.bf16.mxu0 0
    %914 = vmatpush2.bf16.msra.mxu0 0
    %915 = vmatprep.subr.bf16.mxu0 0
    %916 = vmatpush2.bf16.msra.mxu0 0
    %917 = vmatprep.subr.bf16.mxu0 0
    %918 = vmatpush2.bf16.msra.mxu0 0
    %919 = vmatprep.subr.bf16.mxu0 0
    %920 = vmatpush2.bf16.msra.mxu0 0
    %921 = vmatprep.subr.bf16.mxu0 0
    %922 = vmatpush2.bf16.msra.mxu0 0
    %923 = vmatprep.subr.bf16.mxu0 0
    %924 = vmatpush2.bf16.msra.mxu0 0
    %925 = vmatprep.subr.bf16.mxu0 0
    %926 = vmatpush2.bf16.msra.mxu0 0
    %927 = vmatprep.subr.bf16.mxu0 0
    %928 = vmatpush2.bf16.msra.mxu0 0
    %929 = vmatprep.mubr.bf16.mxu0 0
    %930 = vmatmul.mubr.bf16.gmra.mxu0 %v832
    %v931 = vpop.f32.mrf.mxu0
    %v932 = vadd.f32 0.0, %v931
    %v933 = vpop.f32.mrf.mxu0
    %v934 = vpop.f32.mrf.mxu0
    %v935 = vadd.f32 0.0, %v934
    %v936 = vpop.f32.mrf.mxu0
    %937 = vdwg.mxu0
    %v938 = vadd.f32 %v642, %v932
    %v939 = vadd.f32 %v645, %v935
    %v940 = vtanh.pop %v938
    %v941 = vtanh.pop %v939
    %v942 = vsub.f32 1.0, %v813
    %v943 = vsub.f32 1.0, %v815
    %v944 = vmul.f32 %v942, %v124
    %v945 = vmul.f32 %v943, %v125
    %v946 = vmul.f32 %v813, %v940
    %v947 = vmul.f32 %v815, %v941
    %v948 = vadd.f32 %v944, %v946
    %v949 = vadd.f32 %v945, %v947
    %950 = vst [vmem:[#allocation13] sm:$0xff] %v948
    %951 = vst [vmem:[#allocation13 + $0x8] sm:$0xff] %v949
    // Predicated region
    $region70: #{_forward_2d.1} parent=1 // pred_check
      _
    $region71: #{_forward_2d.1} parent=1 // pred_check_branch
      %953 = sbr.rel (0) target = $region73
    $region72: #{_forward_2d.1} parent=1 // pred_region
      %s955 = ssub.s32 256, 256
      %956 = vsyncadd [#allocation4], %s955
      %s957 = sshll.u32 [#allocation13], 4
      %s958 = int_to_ptr.vmem [resolvable:$true] %s957
      %963 = dma.vmem_to_hbm [thread:$0]  %s958, 256, %s11, [#allocation4], 128, 128, 8
    $region73: #{_forward_2d.1} parent=1 // pred_fallthru
      _
    // Predicated region
    $region74: #{_forward_2d.1} parent=1 // pred_check
      _
    $region75: #{_forward_2d.1} parent=1 // pred_check_branch
      %965 = sbr.rel (0) target = $region77
    $region76: #{_forward_2d.1} parent=1 // pred_region
      %966 = dma.done [#allocation4], 256
    $region77: #{_forward_2d.1} parent=1 // pred_fallthru
      _
    %967 = vsyncpa [#allocation3], 1
    %968 = vsyncpa [#allocation6], 1
    %969 = vsyncpa [#allocation9], 1
    %970 = vsyncpa [#allocation12], 1
    %971 = vsyncpa [#allocation4], 1

</llo_original>
